<compile_context>
chip_gen: v5e
topology: v5e:2x2
jax: 0.10.0
libtpu: 0.0.40
codegen_flags: <defaults>
</compile_context>

<pallas_src>
import jax
import jax.numpy as jnp
from jax import lax
from jax.experimental import pallas as pl
from jax.experimental.pallas import tpu as pltpu

EMBED_SIZE = 32          # small embed_size consistent with the module (num_heads=8 divides it)
FEAT_DIM = 12495         # 3 anchors * 7 * 7 grid * 85 channels, fixed by Linear(12495, E)
LANE = 128               # TPU lane width; K is padded (once, on the weight) to a multiple


def _round_up(x, m):
    return (x + m - 1) // m * m


def encoder_head_kernel(x_ref, wt_ref, shift_ref, o_ref, xp_ref):
    """Fused head: o = relu(x @ W_folded^T + shift), single invocation."""
    k = x_ref.shape[1]
    # Stage the unpadded activations into a lane-aligned, zero-filled scratch.
    # The K tail is zero on BOTH operands (weight rows were zero-padded once
    # at prep time), so the padded contraction contributes exactly 0.
    xp_ref[...] = jnp.zeros_like(xp_ref)
    xp_ref[:, :k] = x_ref[...].astype(xp_ref.dtype)

    # NT matmul on the MXU: [B, Kp] x [E, Kp] contracted on dim 1 -> [B, E],
    # f32 accumulation (native mode for both f32 and bf16 weight paths).
    acc = lax.dot_general(
        xp_ref[...], wt_ref[...],
        dimension_numbers=(((1,), (1,)), ((), ())),
        preferred_element_type=jnp.float32,
    )
    o_ref[...] = jnp.maximum(acc + shift_ref[...], 0.0).astype(o_ref.dtype)


def prepare_params(w, b, gamma, beta, running_mean, running_var,
                   eps=1e-5, weight_dtype=jnp.float32):
    """One-time parameter prep (eval mode => weights/stats are static).

    - folds the BN scale (gamma / sqrt(var+eps)) into the weight columns;
    - transposes to [E, K] so the long K axis sits on lanes (dense under
      (8,128) tiling: ~1.6 MB instead of ~6.4 MB lane-padded);
    - zero-pads K to a lane multiple ONCE (guards the in-kernel staging pad);
    - folds Linear bias + BN running mean/beta into a per-channel shift:
          y = x @ (W * scale)^T + shift,   shift = (b - mean)*scale + beta.
    """
    K, E = w.shape
    Kp = _round_up(K, LANE)
    scale = (gamma / jnp.sqrt(running_var + eps)).astype(jnp.float32)
    shift = ((b - running_mean) * scale + beta).astype(jnp.float32)
    wt = (w.astype(jnp.float32) * scale[None, :]).T          # [E, K]
    wt_p = jnp.pad(wt, ((0, 0), (0, Kp - K))).astype(weight_dtype)   # [E, Kp]
    return wt_p, shift.reshape(1, E)


@jax.jit
def yolov3_encoder_head(feat, wt_p, shift):
    """feat: [B, 12495] flattened YOLOv3 head features -> [B, E] embedding."""
    B, _ = feat.shape
    E, Kp = wt_p.shape

    # No grid: the whole problem (~2 MB resident) fits in VMEM on every
    # generation, so the kernel runs once with all operands whole-array
    # resident (no per-step overhead, no accumulator carry, no per-call pad).
    return pl.pallas_call(
        encoder_head_kernel,
        out_shape=jax.ShapeDtypeStruct((B, E), feat.dtype),
        in_specs=[
            pl.BlockSpec(memory_space=pltpu.MemorySpace.VMEM),   # activations [B, K] (unpadded)
            pl.BlockSpec(memory_space=pltpu.MemorySpace.VMEM),   # folded weight [E, Kp]
            pl.BlockSpec(memory_space=pltpu.MemorySpace.VMEM),   # fused bias/BN shift [1, E]
        ],
        out_specs=pl.BlockSpec(memory_space=pltpu.MemorySpace.VMEM),
        scratch_shapes=[pltpu.VMEM((B, Kp), wt_p.dtype)],        # staging pad buffer
    )(feat, wt_p, shift)


if __name__ == "__main__":
    key = jax.random.PRNGKey(0)
    k1, k2, k3, k4, k5, k6, k7 = jax.random.split(key, 7)
    B = 2

    # TODO(synk): the YOLOv3 backbone (torch.hub 'ultralytics/yolov3') has no clean
    # Pallas equivalent; we synthesize its flattened third-scale head output
    # [B, 3*7*7*85] = [B, 12495] directly as the kernel input.
    feat = jax.random.normal(k1, (B, FEAT_DIM), dtype=jnp.float32)

    # Linear(12495, embed_size): PyTorch stores weight as [E, K]; math below uses [K, E].
    w = 0.01 * jax.random.normal(k2, (FEAT_DIM, EMBED_SIZE), dtype=jnp.float32)
    b = 0.01 * jax.random.normal(k3, (EMBED_SIZE,), dtype=jnp.float32)

    # BatchNorm1d(embed_size), deterministic synthetic running stats / affine params.
    gamma = 1.0 + 0.1 * jax.random.normal(k4, (EMBED_SIZE,), dtype=jnp.float32)
    beta = 0.1 * jax.random.normal(k5, (EMBED_SIZE,), dtype=jnp.float32)
    running_mean = 0.1 * jax.random.normal(k6, (EMBED_SIZE,), dtype=jnp.float32)
    running_var = jnp.abs(1.0 + 0.1 * jax.random.normal(k7, (EMBED_SIZE,),
                                                        dtype=jnp.float32))

    # One-time parameter preparation (transposed+scaled+padded weight, folded
    # shift), outside the hot path.
    wt_p, shift = prepare_params(w, b, gamma, beta, running_mean, running_var)
    wt_p, shift = jax.block_until_ready((wt_p, shift))

    out = yolov3_encoder_head(feat, wt_p, shift)
    out = jax.block_until_ready(out)

    # plain-JAX reference for the implemented path (eval-mode BN semantics).
    ref = jnp.maximum(
        (feat @ w + b - running_mean) * (gamma / jnp.sqrt(running_var + 1e-5)) + beta,
        0.0,
    )
    assert out.shape == (B, EMBED_SIZE)
    assert jnp.allclose(out, ref, atol=1e-3, rtol=1e-3), "kernel/reference mismatch"
    print("KERNEL_OK")
</pallas_src>

<mosaic_0001>
module attributes {stable_mosaic.version = 11 : i64} {
  func.func @encoder_head_kernel(%arg0: memref<2x12495xf32, #tpu.memory_space<vmem>>, %arg1: memref<32x12544xf32, #tpu.memory_space<vmem>>, %arg2: memref<1x32xf32, #tpu.memory_space<vmem>>, %arg3: memref<2x32xf32, #tpu.memory_space<vmem>>, %arg4: memref<2x12544xf32, #tpu.memory_space<vmem>>) attributes {dimension_semantics = [], scalar_prefetch = 0 : i64, scratch_operands = 1 : i64, tpu.core_type = #tpu.core_type<tc>} {
    %cst = arith.constant 0.000000e+00 : f32
    %0 = vector.broadcast %cst : f32 to vector<2x12544xf32>
    %c0 = arith.constant 0 : index
    %c0_0 = arith.constant 0 : index
    %1 = vector.load %arg4[%c0, %c0_0] : memref<2x12544xf32, #tpu.memory_space<vmem>>, vector<2x12544xf32>
    tpu.vector_store %arg4[%c0, %c0_0], %0 {strides = array<i32>} : memref<2x12544xf32, #tpu.memory_space<vmem>>, vector<2x12544xf32>,
    %c0_1 = arith.constant 0 : index
    %c0_2 = arith.constant 0 : index
    %2 = vector.load %arg0[%c0_1, %c0_2] : memref<2x12495xf32, #tpu.memory_space<vmem>>, vector<2x12495xf32>
    %c0_3 = arith.constant 0 : index
    %c0_4 = arith.constant 0 : index
    %3 = vector.load %arg4[%c0_3, %c0_4] : memref<2x12544xf32, #tpu.memory_space<vmem>>, vector<2x12495xf32>
    tpu.vector_store %arg4[%c0_3, %c0_4], %2 {strides = array<i32>} : memref<2x12544xf32, #tpu.memory_space<vmem>>, vector<2x12495xf32>,
    %c0_5 = arith.constant 0 : index
    %c0_6 = arith.constant 0 : index
    %4 = vector.load %arg4[%c0_5, %c0_6] : memref<2x12544xf32, #tpu.memory_space<vmem>>, vector<2x12544xf32>
    %c0_7 = arith.constant 0 : index
    %c0_8 = arith.constant 0 : index
    %5 = vector.load %arg1[%c0_7, %c0_8] : memref<32x12544xf32, #tpu.memory_space<vmem>>, vector<32x12544xf32>
    %cst_9 = arith.constant dense<0.000000e+00> : vector<2x32xf32>
    %6 = tpu.matmul %4, %5, %cst_9 {dimension_numbers = #tpu.dot_dimension_numbers<[1], [1], [0], [0], [0, 0, 1, 0], [], []>} : vector<2x12544xf32>, vector<32x12544xf32>, vector<2x32xf32> -> vector<2x32xf32>
    %c0_10 = arith.constant 0 : index
    %c0_11 = arith.constant 0 : index
    %7 = vector.load %arg2[%c0_10, %c0_11] : memref<1x32xf32, #tpu.memory_space<vmem>>, vector<1x32xf32>
    %8 = vector.broadcast %7 : vector<1x32xf32> to vector<2x32xf32>
    %9 = arith.addf %6, %8 : vector<2x32xf32>
    %cst_12 = arith.constant 0.000000e+00 : f32
    %10 = vector.broadcast %cst_12 : f32 to vector<2x32xf32>
    %11 = arith.maximumf %9, %10 : vector<2x32xf32>
    %c0_13 = arith.constant 0 : index
    %c0_14 = arith.constant 0 : index
    %12 = vector.load %arg3[%c0_13, %c0_14] : memref<2x32xf32, #tpu.memory_space<vmem>>, vector<2x32xf32>
    tpu.vector_store %arg3[%c0_13, %c0_14], %11 {strides = array<i32>} : memref<2x32xf32, #tpu.memory_space<vmem>>, vector<2x32xf32>,
    return
  }
}

</mosaic_0001>

<llo_original>
// kernel: yolov3_encoder_head.1
$region0: #{yolov3_encoder_head.1}
  #allocation0 [shape = 'u32[]', space=smem, size = 0x4, offset = 0x4, fixed_abs, tag = 'smem constant byte address 0x4 - core index']
  #allocation1 [shape = 'u32[72,128]{1,0:T(1,128)}', space=vmem, size = 0x9000, scoped, tag = 'internal scratch']
  #allocation2 [shape = 'f32[2,12544]{1,0:T(2,128)}', space=vmem, size = 0x18800, scoped, tag = 'scratch operand']
  %s0 = inlined_call_operand.hbm [shape: f32[2,12495], index: 0, kind: input, shape index: {}]
  %s1 = inlined_call_operand.hbm [shape: f32[32,12544], index: 1, kind: input, shape index: {}]
  %s2 = inlined_call_operand.hbm [shape: f32[1,32], index: 2, kind: input, shape index: {}]
  %s3 = inlined_call_operand.hbm [shape: f32[2,32], index: 3, kind: output, shape index: {}]
  %s4 = sld [smem:[#allocation0]]
  $region34: #{yolov3_encoder_head.1} parent=0
    _
  %s6 = ssub.s32 1, %s4
  %s7 = scalar_select 0, %s6, %s4
  $region1: #{yolov3_encoder_head.1} parent=0
    #allocation3 [shape = 'u8[100352]{0}', space=vmem, size = 0x18800, scoped, tag = 'input window, operand 0, single buffered']
    #allocation4 [shape = 's32[1]{0}', space=sflag, size = 0x4, scoped, tag = 'scoped memory for yolov3_encoder_head.1']
    #allocation5 [shape = 's32[1]{0}', space=sflag, size = 0x4, scoped, tag = 'scoped memory for yolov3_encoder_head.1']
    #allocation6 [shape = 'u8[1605632]{0}', space=vmem, size = 0x188000, scoped, tag = 'input window, operand 1, single buffered']
    #allocation7 [shape = 's32[1]{0}', space=sflag, size = 0x4, scoped, tag = 'scoped memory for yolov3_encoder_head.1']
    #allocation8 [shape = 'u8[512]{0}', space=vmem, size = 0x400, scoped, tag = 'input window, operand 2, single buffered']
    #allocation9 [shape = 'u8[1024]{0}', space=vmem, size = 0x400, scoped, tag = 'output window, operand 0, single buffered']
    %8 = vsyncpa [#allocation4], 0
    %9 = vsyncpa [#allocation7], 0
    %10 = vsyncpa [#allocation5], 0
    // Predicated region
    $region2: #{yolov3_encoder_head.1} parent=1 // pred_check
      _
    $region3: #{yolov3_encoder_head.1} parent=1 // pred_check_branch
      %12 = sbr.rel (0) target = $region5
    $region4: #{yolov3_encoder_head.1} parent=1 // pred_region
      %14 = vsyncadd [#allocation4], 0
      %s16 = sshll.u32 %s0, 4
      %s17 = int_to_ptr.hbm [resolvable:$true] %s16
      %s18 = sshll.u32 [#allocation3], 4
      %s19 = int_to_ptr.vmem [resolvable:$true] %s18
      %21 = dma.hbm_to_vmem [thread:$0]  %s17, 3136, %s19, [#allocation4]
    $region5: #{yolov3_encoder_head.1} parent=1 // pred_fallthru
      _
    // Predicated region
    $region6: #{yolov3_encoder_head.1} parent=1 // pred_check
      _
    $region7: #{yolov3_encoder_head.1} parent=1 // pred_check_branch
      %23 = sbr.rel (0) target = $region9
    $region8: #{yolov3_encoder_head.1} parent=1 // pred_region
      %25 = vsyncadd [#allocation7], 0
      %s26 = sshll.u32 %s1, 4
      %s27 = int_to_ptr.hbm [resolvable:$true] %s26
      %s28 = sshll.u32 [#allocation6], 4
      %s29 = int_to_ptr.vmem [resolvable:$true] %s28
      %34 = dma.hbm_to_vmem [thread:$0]  %s27, 50176, %s29, [#allocation7], 12544, 12544, 784
    $region9: #{yolov3_encoder_head.1} parent=1 // pred_fallthru
      _
    // Predicated region
    $region10: #{yolov3_encoder_head.1} parent=1 // pred_check
      _
    $region11: #{yolov3_encoder_head.1} parent=1 // pred_check_branch
      %36 = sbr.rel (0) target = $region13
    $region12: #{yolov3_encoder_head.1} parent=1 // pred_region
      %38 = vsyncadd [#allocation7], 0
      %s40 = sshll.u32 %s2, 4
      %s41 = int_to_ptr.hbm [resolvable:$true] %s40
      %s42 = sshll.u32 [#allocation8], 4
      %s43 = int_to_ptr.vmem [resolvable:$true] %s42
      %45 = dma.hbm_to_vmem [thread:$0]  %s41, 16, %s43, [#allocation7]
    $region13: #{yolov3_encoder_head.1} parent=1 // pred_fallthru
      _
    // Predicated region
    $region14: #{yolov3_encoder_head.1} parent=1 // pred_check
      _
    $region15: #{yolov3_encoder_head.1} parent=1 // pred_check_branch
      %47 = sbr.rel (0) target = $region17
    $region16: #{yolov3_encoder_head.1} parent=1 // pred_region
      %49 = dma.done [#allocation4], 3136
    $region17: #{yolov3_encoder_head.1} parent=1 // pred_fallthru
      _
    // Predicated region
    $region18: #{yolov3_encoder_head.1} parent=1 // pred_check
      _
    $region19: #{yolov3_encoder_head.1} parent=1 // pred_check_branch
      %51 = sbr.rel (0) target = $region21
    $region20: #{yolov3_encoder_head.1} parent=1 // pred_region
      %53 = dma.done [#allocation7], 50176
    $region21: #{yolov3_encoder_head.1} parent=1 // pred_fallthru
      _
    // Predicated region
    $region22: #{yolov3_encoder_head.1} parent=1 // pred_check
      _
    $region23: #{yolov3_encoder_head.1} parent=1 // pred_check_branch
      %55 = sbr.rel (0) target = $region25
    $region24: #{yolov3_encoder_head.1} parent=1 // pred_region
      %57 = dma.done [#allocation7], 16
    $region25: #{yolov3_encoder_head.1} parent=1 // pred_fallthru
      _
    %58 = vst [vmem:[#allocation2] sm:$0xff] 0.0
    %59 = vst [vmem:[#allocation2 + $0x8] sm:$0xff] 0.0
    %60 = vst [vmem:[#allocation2 + $0x10] sm:$0xff] 0.0
    %61 = vst [vmem:[#allocation2 + $0x18] sm:$0xff] 0.0
    %62 = vst [vmem:[#allocation2 + $0x20] sm:$0xff] 0.0
    %63 = vst [vmem:[#allocation2 + $0x28] sm:$0xff] 0.0
    %64 = vst [vmem:[#allocation2 + $0x30] sm:$0xff] 0.0
    %65 = vst [vmem:[#allocation2 + $0x38] sm:$0xff] 0.0
    %66 = vst [vmem:[#allocation2 + $0x40] sm:$0xff] 0.0
    %67 = vst [vmem:[#allocation2 + $0x48] sm:$0xff] 0.0
    %68 = vst [vmem:[#allocation2 + $0x50] sm:$0xff] 0.0
    %69 = vst [vmem:[#allocation2 + $0x58] sm:$0xff] 0.0
    %70 = vst [vmem:[#allocation2 + $0x60] sm:$0xff] 0.0
    %71 = vst [vmem:[#allocation2 + $0x68] sm:$0xff] 0.0
    %72 = vst [vmem:[#allocation2 + $0x70] sm:$0xff] 0.0
    %73 = vst [vmem:[#allocation2 + $0x78] sm:$0xff] 0.0
    %74 = vst [vmem:[#allocation2 + $0x80] sm:$0xff] 0.0
    %75 = vst [vmem:[#allocation2 + $0x88] sm:$0xff] 0.0
    %76 = vst [vmem:[#allocation2 + $0x90] sm:$0xff] 0.0
    %77 = vst [vmem:[#allocation2 + $0x98] sm:$0xff] 0.0
    %78 = vst [vmem:[#allocation2 + $0xa0] sm:$0xff] 0.0
    %79 = vst [vmem:[#allocation2 + $0xa8] sm:$0xff] 0.0
    %80 = vst [vmem:[#allocation2 + $0xb0] sm:$0xff] 0.0
    %81 = vst [vmem:[#allocation2 + $0xb8] sm:$0xff] 0.0
    %82 = vst [vmem:[#allocation2 + $0xc0] sm:$0xf] 0.0
    %v83 = vld [vmem:[#allocation3] sm:$0xff]
    %v84 = vld [vmem:[#allocation3 + $0x8] sm:$0xff]
    %v85 = vld [vmem:[#allocation3 + $0x10] sm:$0xff]
    %v86 = vld [vmem:[#allocation3 + $0x18] sm:$0xff]
    %v87 = vld [vmem:[#allocation3 + $0x20] sm:$0xff]
    %v88 = vld [vmem:[#allocation3 + $0x28] sm:$0xff]
    %v89 = vld [vmem:[#allocation3 + $0x30] sm:$0xff]
    %v90 = vld [vmem:[#allocation3 + $0x38] sm:$0xff]
    %v91 = vld [vmem:[#allocation3 + $0x40] sm:$0xff]
    %v92 = vld [vmem:[#allocation3 + $0x48] sm:$0xff]
    %v93 = vld [vmem:[#allocation3 + $0x50] sm:$0xff]
    %v94 = vld [vmem:[#allocation3 + $0x58] sm:$0xff]
    %v95 = vld [vmem:[#allocation3 + $0x60] sm:$0xff]
    %v96 = vld [vmem:[#allocation3 + $0x68] sm:$0xff]
    %v97 = vld [vmem:[#allocation3 + $0x70] sm:$0xff]
    %v98 = vld [vmem:[#allocation3 + $0x78] sm:$0xff]
    %v99 = vld [vmem:[#allocation3 + $0x80] sm:$0xff]
    %v100 = vld [vmem:[#allocation3 + $0x88] sm:$0xff]
    %v101 = vld [vmem:[#allocation3 + $0x90] sm:$0xff]
    %v102 = vld [vmem:[#allocation3 + $0x98] sm:$0xff]
    %v103 = vld [vmem:[#allocation3 + $0xa0] sm:$0xff]
    %v104 = vld [vmem:[#allocation3 + $0xa8] sm:$0xff]
    %v105 = vld [vmem:[#allocation3 + $0xb0] sm:$0xff]
    %v106 = vld [vmem:[#allocation3 + $0xb8] sm:$0xff]
    %v107 = vld [vmem:[#allocation3 + $0xc0] sm:$0xf]
    %108 = vst [vmem:[#allocation2] sm:$0xff] %v83
    %109 = vst [vmem:[#allocation2 + $0x8] sm:$0xff] %v84
    %110 = vst [vmem:[#allocation2 + $0x10] sm:$0xff] %v85
    %111 = vst [vmem:[#allocation2 + $0x18] sm:$0xff] %v86
    %112 = vst [vmem:[#allocation2 + $0x20] sm:$0xff] %v87
    %113 = vst [vmem:[#allocation2 + $0x28] sm:$0xff] %v88
    %114 = vst [vmem:[#allocation2 + $0x30] sm:$0xff] %v89
    %115 = vst [vmem:[#allocation2 + $0x38] sm:$0xff] %v90
    %116 = vst [vmem:[#allocation2 + $0x40] sm:$0xff] %v91
    %117 = vst [vmem:[#allocation2 + $0x48] sm:$0xff] %v92
    %118 = vst [vmem:[#allocation2 + $0x50] sm:$0xff] %v93
    %119 = vst [vmem:[#allocation2 + $0x58] sm:$0xff] %v94
    %120 = vst [vmem:[#allocation2 + $0x60] sm:$0xff] %v95
    %121 = vst [vmem:[#allocation2 + $0x68] sm:$0xff] %v96
    %122 = vst [vmem:[#allocation2 + $0x70] sm:$0xff] %v97
    %123 = vst [vmem:[#allocation2 + $0x78] sm:$0xff] %v98
    %124 = vst [vmem:[#allocation2 + $0x80] sm:$0xff] %v99
    %125 = vst [vmem:[#allocation2 + $0x88] sm:$0xff] %v100
    %126 = vst [vmem:[#allocation2 + $0x90] sm:$0xff] %v101
    %127 = vst [vmem:[#allocation2 + $0x98] sm:$0xff] %v102
    %128 = vst [vmem:[#allocation2 + $0xa0] sm:$0xff] %v103
    %129 = vst [vmem:[#allocation2 + $0xa8] sm:$0xff] %v104
    %130 = vst [vmem:[#allocation2 + $0xb0] sm:$0xff] %v105
    %131 = vst [vmem:[#allocation2 + $0xb8] sm:$0xff] %v106
    %vm132 = vcmask 1041408
    %vm133 = vcmask 642050
    %vm134 = vmor %vm133, %vm132
    %135 = vst.msk [vmem:[#allocation2 + $0xc0] sm:$0xf] %vm134, %v107
    %v136 = vld [vmem:[#allocation2] sm:$0xff]
    %v137 = vld [vmem:[#allocation2 + $0x8] sm:$0xff]
    %v138 = vld [vmem:[#allocation2 + $0x10] sm:$0xff]
    %v139 = vld [vmem:[#allocation2 + $0x18] sm:$0xff]
    %v140 = vld [vmem:[#allocation2 + $0x20] sm:$0xff]
    %v141 = vld [vmem:[#allocation2 + $0x28] sm:$0xff]
    %v142 = vld [vmem:[#allocation2 + $0x30] sm:$0xff]
    %v143 = vld [vmem:[#allocation2 + $0x38] sm:$0xff]
    %v144 = vld [vmem:[#allocation2 + $0x40] sm:$0xff]
    %v145 = vld [vmem:[#allocation2 + $0x48] sm:$0xff]
    %v146 = vld [vmem:[#allocation2 + $0x50] sm:$0xff]
    %v147 = vld [vmem:[#allocation2 + $0x58] sm:$0xff]
    %v148 = vld [vmem:[#allocation2 + $0x60] sm:$0xff]
    %v149 = vld [vmem:[#allocation2 + $0x68] sm:$0xff]
    %v150 = vld [vmem:[#allocation2 + $0x70] sm:$0xff]
    %v151 = vld [vmem:[#allocation2 + $0x78] sm:$0xff]
    %v152 = vld [vmem:[#allocation2 + $0x80] sm:$0xff]
    %v153 = vld [vmem:[#allocation2 + $0x88] sm:$0xff]
    %v154 = vld [vmem:[#allocation2 + $0x90] sm:$0xff]
    %v155 = vld [vmem:[#allocation2 + $0x98] sm:$0xff]
    %v156 = vld [vmem:[#allocation2 + $0xa0] sm:$0xff]
    %v157 = vld [vmem:[#allocation2 + $0xa8] sm:$0xff]
    %v158 = vld [vmem:[#allocation2 + $0xb0] sm:$0xff]
    %v159 = vld [vmem:[#allocation2 + $0xb8] sm:$0xff]
    %v160 = vld [vmem:[#allocation2 + $0xc0] sm:$0xf]
    %v161 = vld [vmem:[#allocation6] sm:$0xff]
    %v162 = vld [vmem:[#allocation6 + $0x8] sm:$0xff]
    %v163 = vld [vmem:[#allocation6 + $0x10] sm:$0xff]
    %v164 = vld [vmem:[#allocation6 + $0x18] sm:$0xff]
    %v165 = vld [vmem:[#allocation6 + $0x20] sm:$0xff]
    %v166 = vld [vmem:[#allocation6 + $0x28] sm:$0xff]
    %v167 = vld [vmem:[#allocation6 + $0x30] sm:$0xff]
    %v168 = vld [vmem:[#allocation6 + $0x38] sm:$0xff]
    %v169 = vld [vmem:[#allocation6 + $0x40] sm:$0xff]
    %v170 = vld [vmem:[#allocation6 + $0x48] sm:$0xff]
    %v171 = vld [vmem:[#allocation6 + $0x50] sm:$0xff]
    %v172 = vld [vmem:[#allocation6 + $0x58] sm:$0xff]
    %v173 = vld [vmem:[#allocation6 + $0x60] sm:$0xff]
    %v174 = vld [vmem:[#allocation6 + $0x68] sm:$0xff]
    %v175 = vld [vmem:[#allocation6 + $0x70] sm:$0xff]
    %v176 = vld [vmem:[#allocation6 + $0x78] sm:$0xff]
    %v177 = vld [vmem:[#allocation6 + $0x80] sm:$0xff]
    %v178 = vld [vmem:[#allocation6 + $0x88] sm:$0xff]
    %v179 = vld [vmem:[#allocation6 + $0x90] sm:$0xff]
    %v180 = vld [vmem:[#allocation6 + $0x98] sm:$0xff]
    %v181 = vld [vmem:[#allocation6 + $0xa0] sm:$0xff]
    %v182 = vld [vmem:[#allocation6 + $0xa8] sm:$0xff]
    %v183 = vld [vmem:[#allocation6 + $0xb0] sm:$0xff]
    %v184 = vld [vmem:[#allocation6 + $0xb8] sm:$0xff]
    %v185 = vld [vmem:[#allocation6 + $0xc0] sm:$0xff]
    %v186 = vld [vmem:[#allocation6 + $0xc8] sm:$0xff]
    %v187 = vld [vmem:[#allocation6 + $0xd0] sm:$0xff]
    %v188 = vld [vmem:[#allocation6 + $0xd8] sm:$0xff]
    %v189 = vld [vmem:[#allocation6 + $0xe0] sm:$0xff]
    %v190 = vld [vmem:[#allocation6 + $0xe8] sm:$0xff]
    %v191 = vld [vmem:[#allocation6 + $0xf0] sm:$0xff]
    %v192 = vld [vmem:[#allocation6 + $0xf8] sm:$0xff]
    %v193 = vld [vmem:[#allocation6 + $0x100] sm:$0xff]
    %v194 = vld [vmem:[#allocation6 + $0x108] sm:$0xff]
    %v195 = vld [vmem:[#allocation6 + $0x110] sm:$0xff]
    %v196 = vld [vmem:[#allocation6 + $0x118] sm:$0xff]
    %v197 = vld [vmem:[#allocation6 + $0x120] sm:$0xff]
    %v198 = vld [vmem:[#allocation6 + $0x128] sm:$0xff]
    %v199 = vld [vmem:[#allocation6 + $0x130] sm:$0xff]
    %v200 = vld [vmem:[#allocation6 + $0x138] sm:$0xff]
    %v201 = vld [vmem:[#allocation6 + $0x140] sm:$0xff]
    %v202 = vld [vmem:[#allocation6 + $0x148] sm:$0xff]
    %v203 = vld [vmem:[#allocation6 + $0x150] sm:$0xff]
    %v204 = vld [vmem:[#allocation6 + $0x158] sm:$0xff]
    %v205 = vld [vmem:[#allocation6 + $0x160] sm:$0xff]
    %v206 = vld [vmem:[#allocation6 + $0x168] sm:$0xff]
    %v207 = vld [vmem:[#allocation6 + $0x170] sm:$0xff]
    %v208 = vld [vmem:[#allocation6 + $0x178] sm:$0xff]
    %v209 = vld [vmem:[#allocation6 + $0x180] sm:$0xff]
    %v210 = vld [vmem:[#allocation6 + $0x188] sm:$0xff]
    %v211 = vld [vmem:[#allocation6 + $0x190] sm:$0xff]
    %v212 = vld [vmem:[#allocation6 + $0x198] sm:$0xff]
    %v213 = vld [vmem:[#allocation6 + $0x1a0] sm:$0xff]
    %v214 = vld [vmem:[#allocation6 + $0x1a8] sm:$0xff]
    %v215 = vld [vmem:[#allocation6 + $0x1b0] sm:$0xff]
    %v216 = vld [vmem:[#allocation6 + $0x1b8] sm:$0xff]
    %v217 = vld [vmem:[#allocation6 + $0x1c0] sm:$0xff]
    %v218 = vld [vmem:[#allocation6 + $0x1c8] sm:$0xff]
    %v219 = vld [vmem:[#allocation6 + $0x1d0] sm:$0xff]
    %v220 = vld [vmem:[#allocation6 + $0x1d8] sm:$0xff]
    %v221 = vld [vmem:[#allocation6 + $0x1e0] sm:$0xff]
    %v222 = vld [vmem:[#allocation6 + $0x1e8] sm:$0xff]
    %v223 = vld [vmem:[#allocation6 + $0x1f0] sm:$0xff]
    %v224 = vld [vmem:[#allocation6 + $0x1f8] sm:$0xff]
    %v225 = vld [vmem:[#allocation6 + $0x200] sm:$0xff]
    %v226 = vld [vmem:[#allocation6 + $0x208] sm:$0xff]
    %v227 = vld [vmem:[#allocation6 + $0x210] sm:$0xff]
    %v228 = vld [vmem:[#allocation6 + $0x218] sm:$0xff]
    %v229 = vld [vmem:[#allocation6 + $0x220] sm:$0xff]
    %v230 = vld [vmem:[#allocation6 + $0x228] sm:$0xff]
    %v231 = vld [vmem:[#allocation6 + $0x230] sm:$0xff]
    %v232 = vld [vmem:[#allocation6 + $0x238] sm:$0xff]
    %v233 = vld [vmem:[#allocation6 + $0x240] sm:$0xff]
    %v234 = vld [vmem:[#allocation6 + $0x248] sm:$0xff]
    %v235 = vld [vmem:[#allocation6 + $0x250] sm:$0xff]
    %v236 = vld [vmem:[#allocation6 + $0x258] sm:$0xff]
    %v237 = vld [vmem:[#allocation6 + $0x260] sm:$0xff]
    %v238 = vld [vmem:[#allocation6 + $0x268] sm:$0xff]
    %v239 = vld [vmem:[#allocation6 + $0x270] sm:$0xff]
    %v240 = vld [vmem:[#allocation6 + $0x278] sm:$0xff]
    %v241 = vld [vmem:[#allocation6 + $0x280] sm:$0xff]
    %v242 = vld [vmem:[#allocation6 + $0x288] sm:$0xff]
    %v243 = vld [vmem:[#allocation6 + $0x290] sm:$0xff]
    %v244 = vld [vmem:[#allocation6 + $0x298] sm:$0xff]
    %v245 = vld [vmem:[#allocation6 + $0x2a0] sm:$0xff]
    %v246 = vld [vmem:[#allocation6 + $0x2a8] sm:$0xff]
    %v247 = vld [vmem:[#allocation6 + $0x2b0] sm:$0xff]
    %v248 = vld [vmem:[#allocation6 + $0x2b8] sm:$0xff]
    %v249 = vld [vmem:[#allocation6 + $0x2c0] sm:$0xff]
    %v250 = vld [vmem:[#allocation6 + $0x2c8] sm:$0xff]
    %v251 = vld [vmem:[#allocation6 + $0x2d0] sm:$0xff]
    %v252 = vld [vmem:[#allocation6 + $0x2d8] sm:$0xff]
    %v253 = vld [vmem:[#allocation6 + $0x2e0] sm:$0xff]
    %v254 = vld [vmem:[#allocation6 + $0x2e8] sm:$0xff]
    %v255 = vld [vmem:[#allocation6 + $0x2f0] sm:$0xff]
    %v256 = vld [vmem:[#allocation6 + $0x2f8] sm:$0xff]
    %v257 = vld [vmem:[#allocation6 + $0x300] sm:$0xff]
    %v258 = vld [vmem:[#allocation6 + $0x308] sm:$0xff]
    %v259 = vld [vmem:[#allocation6 + $0x310] sm:$0xff]
    %v260 = vld [vmem:[#allocation6 + $0x318] sm:$0xff]
    %v261 = vld [vmem:[#allocation6 + $0x320] sm:$0xff]
    %v262 = vld [vmem:[#allocation6 + $0x328] sm:$0xff]
    %v263 = vld [vmem:[#allocation6 + $0x330] sm:$0xff]
    %v264 = vld [vmem:[#allocation6 + $0x338] sm:$0xff]
    %v265 = vld [vmem:[#allocation6 + $0x340] sm:$0xff]
    %v266 = vld [vmem:[#allocation6 + $0x348] sm:$0xff]
    %v267 = vld [vmem:[#allocation6 + $0x350] sm:$0xff]
    %v268 = vld [vmem:[#allocation6 + $0x358] sm:$0xff]
    %v269 = vld [vmem:[#allocation6 + $0x360] sm:$0xff]
    %v270 = vld [vmem:[#allocation6 + $0x368] sm:$0xff]
    %v271 = vld [vmem:[#allocation6 + $0x370] sm:$0xff]
    %v272 = vld [vmem:[#allocation6 + $0x378] sm:$0xff]
    %v273 = vld [vmem:[#allocation6 + $0x380] sm:$0xff]
    %v274 = vld [vmem:[#allocation6 + $0x388] sm:$0xff]
    %v275 = vld [vmem:[#allocation6 + $0x390] sm:$0xff]
    %v276 = vld [vmem:[#allocation6 + $0x398] sm:$0xff]
    %v277 = vld [vmem:[#allocation6 + $0x3a0] sm:$0xff]
    %v278 = vld [vmem:[#allocation6 + $0x3a8] sm:$0xff]
    %v279 = vld [vmem:[#allocation6 + $0x3b0] sm:$0xff]
    %v280 = vld [vmem:[#allocation6 + $0x3b8] sm:$0xff]
    %v281 = vld [vmem:[#allocation6 + $0x3c0] sm:$0xff]
    %v282 = vld [vmem:[#allocation6 + $0x3c8] sm:$0xff]
    %v283 = vld [vmem:[#allocation6 + $0x3d0] sm:$0xff]
    %v284 = vld [vmem:[#allocation6 + $0x3d8] sm:$0xff]
    %v285 = vld [vmem:[#allocation6 + $0x3e0] sm:$0xff]
    %v286 = vld [vmem:[#allocation6 + $0x3e8] sm:$0xff]
    %v287 = vld [vmem:[#allocation6 + $0x3f0] sm:$0xff]
    %v288 = vld [vmem:[#allocation6 + $0x3f8] sm:$0xff]
    %v289 = vld [vmem:[#allocation6 + $0x400] sm:$0xff]
    %v290 = vld [vmem:[#allocation6 + $0x408] sm:$0xff]
    %v291 = vld [vmem:[#allocation6 + $0x410] sm:$0xff]
    %v292 = vld [vmem:[#allocation6 + $0x418] sm:$0xff]
    %v293 = vld [vmem:[#allocation6 + $0x420] sm:$0xff]
    %v294 = vld [vmem:[#allocation6 + $0x428] sm:$0xff]
    %v295 = vld [vmem:[#allocation6 + $0x430] sm:$0xff]
    %v296 = vld [vmem:[#allocation6 + $0x438] sm:$0xff]
    %v297 = vld [vmem:[#allocation6 + $0x440] sm:$0xff]
    %v298 = vld [vmem:[#allocation6 + $0x448] sm:$0xff]
    %v299 = vld [vmem:[#allocation6 + $0x450] sm:$0xff]
    %v300 = vld [vmem:[#allocation6 + $0x458] sm:$0xff]
    %v301 = vld [vmem:[#allocation6 + $0x460] sm:$0xff]
    %v302 = vld [vmem:[#allocation6 + $0x468] sm:$0xff]
    %v303 = vld [vmem:[#allocation6 + $0x470] sm:$0xff]
    %v304 = vld [vmem:[#allocation6 + $0x478] sm:$0xff]
    %v305 = vld [vmem:[#allocation6 + $0x480] sm:$0xff]
    %v306 = vld [vmem:[#allocation6 + $0x488] sm:$0xff]
    %v307 = vld [vmem:[#allocation6 + $0x490] sm:$0xff]
    %v308 = vld [vmem:[#allocation6 + $0x498] sm:$0xff]
    %v309 = vld [vmem:[#allocation6 + $0x4a0] sm:$0xff]
    %v310 = vld [vmem:[#allocation6 + $0x4a8] sm:$0xff]
    %v311 = vld [vmem:[#allocation6 + $0x4b0] sm:$0xff]
    %v312 = vld [vmem:[#allocation6 + $0x4b8] sm:$0xff]
    %v313 = vld [vmem:[#allocation6 + $0x4c0] sm:$0xff]
    %v314 = vld [vmem:[#allocation6 + $0x4c8] sm:$0xff]
    %v315 = vld [vmem:[#allocation6 + $0x4d0] sm:$0xff]
    %v316 = vld [vmem:[#allocation6 + $0x4d8] sm:$0xff]
    %v317 = vld [vmem:[#allocation6 + $0x4e0] sm:$0xff]
    %v318 = vld [vmem:[#allocation6 + $0x4e8] sm:$0xff]
    %v319 = vld [vmem:[#allocation6 + $0x4f0] sm:$0xff]
    %v320 = vld [vmem:[#allocation6 + $0x4f8] sm:$0xff]
    %v321 = vld [vmem:[#allocation6 + $0x500] sm:$0xff]
    %v322 = vld [vmem:[#allocation6 + $0x508] sm:$0xff]
    %v323 = vld [vmem:[#allocation6 + $0x510] sm:$0xff]
    %v324 = vld [vmem:[#allocation6 + $0x518] sm:$0xff]
    %v325 = vld [vmem:[#allocation6 + $0x520] sm:$0xff]
    %v326 = vld [vmem:[#allocation6 + $0x528] sm:$0xff]
    %v327 = vld [vmem:[#allocation6 + $0x530] sm:$0xff]
    %v328 = vld [vmem:[#allocation6 + $0x538] sm:$0xff]
    %v329 = vld [vmem:[#allocation6 + $0x540] sm:$0xff]
    %v330 = vld [vmem:[#allocation6 + $0x548] sm:$0xff]
    %v331 = vld [vmem:[#allocation6 + $0x550] sm:$0xff]
    %v332 = vld [vmem:[#allocation6 + $0x558] sm:$0xff]
    %v333 = vld [vmem:[#allocation6 + $0x560] sm:$0xff]
    %v334 = vld [vmem:[#allocation6 + $0x568] sm:$0xff]
    %v335 = vld [vmem:[#allocation6 + $0x570] sm:$0xff]
    %v336 = vld [vmem:[#allocation6 + $0x578] sm:$0xff]
    %v337 = vld [vmem:[#allocation6 + $0x580] sm:$0xff]
    %v338 = vld [vmem:[#allocation6 + $0x588] sm:$0xff]
    %v339 = vld [vmem:[#allocation6 + $0x590] sm:$0xff]
    %v340 = vld [vmem:[#allocation6 + $0x598] sm:$0xff]
    %v341 = vld [vmem:[#allocation6 + $0x5a0] sm:$0xff]
    %v342 = vld [vmem:[#allocation6 + $0x5a8] sm:$0xff]
    %v343 = vld [vmem:[#allocation6 + $0x5b0] sm:$0xff]
    %v344 = vld [vmem:[#allocation6 + $0x5b8] sm:$0xff]
    %v345 = vld [vmem:[#allocation6 + $0x5c0] sm:$0xff]
    %v346 = vld [vmem:[#allocation6 + $0x5c8] sm:$0xff]
    %v347 = vld [vmem:[#allocation6 + $0x5d0] sm:$0xff]
    %v348 = vld [vmem:[#allocation6 + $0x5d8] sm:$0xff]
    %v349 = vld [vmem:[#allocation6 + $0x5e0] sm:$0xff]
    %v350 = vld [vmem:[#allocation6 + $0x5e8] sm:$0xff]
    %v351 = vld [vmem:[#allocation6 + $0x5f0] sm:$0xff]
    %v352 = vld [vmem:[#allocation6 + $0x5f8] sm:$0xff]
    %v353 = vld [vmem:[#allocation6 + $0x600] sm:$0xff]
    %v354 = vld [vmem:[#allocation6 + $0x608] sm:$0xff]
    %v355 = vld [vmem:[#allocation6 + $0x610] sm:$0xff]
    %v356 = vld [vmem:[#allocation6 + $0x618] sm:$0xff]
    %v357 = vld [vmem:[#allocation6 + $0x620] sm:$0xff]
    %v358 = vld [vmem:[#allocation6 + $0x628] sm:$0xff]
    %v359 = vld [vmem:[#allocation6 + $0x630] sm:$0xff]
    %v360 = vld [vmem:[#allocation6 + $0x638] sm:$0xff]
    %v361 = vld [vmem:[#allocation6 + $0x640] sm:$0xff]
    %v362 = vld [vmem:[#allocation6 + $0x648] sm:$0xff]
    %v363 = vld [vmem:[#allocation6 + $0x650] sm:$0xff]
    %v364 = vld [vmem:[#allocation6 + $0x658] sm:$0xff]
    %v365 = vld [vmem:[#allocation6 + $0x660] sm:$0xff]
    %v366 = vld [vmem:[#allocation6 + $0x668] sm:$0xff]
    %v367 = vld [vmem:[#allocation6 + $0x670] sm:$0xff]
    %v368 = vld [vmem:[#allocation6 + $0x678] sm:$0xff]
    %v369 = vld [vmem:[#allocation6 + $0x680] sm:$0xff]
    %v370 = vld [vmem:[#allocation6 + $0x688] sm:$0xff]
    %v371 = vld [vmem:[#allocation6 + $0x690] sm:$0xff]
    %v372 = vld [vmem:[#allocation6 + $0x698] sm:$0xff]
    %v373 = vld [vmem:[#allocation6 + $0x6a0] sm:$0xff]
    %v374 = vld [vmem:[#allocation6 + $0x6a8] sm:$0xff]
    %v375 = vld [vmem:[#allocation6 + $0x6b0] sm:$0xff]
    %v376 = vld [vmem:[#allocation6 + $0x6b8] sm:$0xff]
    %v377 = vld [vmem:[#allocation6 + $0x6c0] sm:$0xff]
    %v378 = vld [vmem:[#allocation6 + $0x6c8] sm:$0xff]
    %v379 = vld [vmem:[#allocation6 + $0x6d0] sm:$0xff]
    %v380 = vld [vmem:[#allocation6 + $0x6d8] sm:$0xff]
    %v381 = vld [vmem:[#allocation6 + $0x6e0] sm:$0xff]
    %v382 = vld [vmem:[#allocation6 + $0x6e8] sm:$0xff]
    %v383 = vld [vmem:[#allocation6 + $0x6f0] sm:$0xff]
    %v384 = vld [vmem:[#allocation6 + $0x6f8] sm:$0xff]
    %v385 = vld [vmem:[#allocation6 + $0x700] sm:$0xff]
    %v386 = vld [vmem:[#allocation6 + $0x708] sm:$0xff]
    %v387 = vld [vmem:[#allocation6 + $0x710] sm:$0xff]
    %v388 = vld [vmem:[#allocation6 + $0x718] sm:$0xff]
    %v389 = vld [vmem:[#allocation6 + $0x720] sm:$0xff]
    %v390 = vld [vmem:[#allocation6 + $0x728] sm:$0xff]
    %v391 = vld [vmem:[#allocation6 + $0x730] sm:$0xff]
    %v392 = vld [vmem:[#allocation6 + $0x738] sm:$0xff]
    %v393 = vld [vmem:[#allocation6 + $0x740] sm:$0xff]
    %v394 = vld [vmem:[#allocation6 + $0x748] sm:$0xff]
    %v395 = vld [vmem:[#allocation6 + $0x750] sm:$0xff]
    %v396 = vld [vmem:[#allocation6 + $0x758] sm:$0xff]
    %v397 = vld [vmem:[#allocation6 + $0x760] sm:$0xff]
    %v398 = vld [vmem:[#allocation6 + $0x768] sm:$0xff]
    %v399 = vld [vmem:[#allocation6 + $0x770] sm:$0xff]
    %v400 = vld [vmem:[#allocation6 + $0x778] sm:$0xff]
    %v401 = vld [vmem:[#allocation6 + $0x780] sm:$0xff]
    %v402 = vld [vmem:[#allocation6 + $0x788] sm:$0xff]
    %v403 = vld [vmem:[#allocation6 + $0x790] sm:$0xff]
    %v404 = vld [vmem:[#allocation6 + $0x798] sm:$0xff]
    %v405 = vld [vmem:[#allocation6 + $0x7a0] sm:$0xff]
    %v406 = vld [vmem:[#allocation6 + $0x7a8] sm:$0xff]
    %v407 = vld [vmem:[#allocation6 + $0x7b0] sm:$0xff]
    %v408 = vld [vmem:[#allocation6 + $0x7b8] sm:$0xff]
    %v409 = vld [vmem:[#allocation6 + $0x7c0] sm:$0xff]
    %v410 = vld [vmem:[#allocation6 + $0x7c8] sm:$0xff]
    %v411 = vld [vmem:[#allocation6 + $0x7d0] sm:$0xff]
    %v412 = vld [vmem:[#allocation6 + $0x7d8] sm:$0xff]
    %v413 = vld [vmem:[#allocation6 + $0x7e0] sm:$0xff]
    %v414 = vld [vmem:[#allocation6 + $0x7e8] sm:$0xff]
    %v415 = vld [vmem:[#allocation6 + $0x7f0] sm:$0xff]
    %v416 = vld [vmem:[#allocation6 + $0x7f8] sm:$0xff]
    %v417 = vld [vmem:[#allocation6 + $0x800] sm:$0xff]
    %v418 = vld [vmem:[#allocation6 + $0x808] sm:$0xff]
    %v419 = vld [vmem:[#allocation6 + $0x810] sm:$0xff]
    %v420 = vld [vmem:[#allocation6 + $0x818] sm:$0xff]
    %v421 = vld [vmem:[#allocation6 + $0x820] sm:$0xff]
    %v422 = vld [vmem:[#allocation6 + $0x828] sm:$0xff]
    %v423 = vld [vmem:[#allocation6 + $0x830] sm:$0xff]
    %v424 = vld [vmem:[#allocation6 + $0x838] sm:$0xff]
    %v425 = vld [vmem:[#allocation6 + $0x840] sm:$0xff]
    %v426 = vld [vmem:[#allocation6 + $0x848] sm:$0xff]
    %v427 = vld [vmem:[#allocation6 + $0x850] sm:$0xff]
    %v428 = vld [vmem:[#allocation6 + $0x858] sm:$0xff]
    %v429 = vld [vmem:[#allocation6 + $0x860] sm:$0xff]
    %v430 = vld [vmem:[#allocation6 + $0x868] sm:$0xff]
    %v431 = vld [vmem:[#allocation6 + $0x870] sm:$0xff]
    %v432 = vld [vmem:[#allocation6 + $0x878] sm:$0xff]
    %v433 = vld [vmem:[#allocation6 + $0x880] sm:$0xff]
    %v434 = vld [vmem:[#allocation6 + $0x888] sm:$0xff]
    %v435 = vld [vmem:[#allocation6 + $0x890] sm:$0xff]
    %v436 = vld [vmem:[#allocation6 + $0x898] sm:$0xff]
    %v437 = vld [vmem:[#allocation6 + $0x8a0] sm:$0xff]
    %v438 = vld [vmem:[#allocation6 + $0x8a8] sm:$0xff]
    %v439 = vld [vmem:[#allocation6 + $0x8b0] sm:$0xff]
    %v440 = vld [vmem:[#allocation6 + $0x8b8] sm:$0xff]
    %v441 = vld [vmem:[#allocation6 + $0x8c0] sm:$0xff]
    %v442 = vld [vmem:[#allocation6 + $0x8c8] sm:$0xff]
    %v443 = vld [vmem:[#allocation6 + $0x8d0] sm:$0xff]
    %v444 = vld [vmem:[#allocation6 + $0x8d8] sm:$0xff]
    %v445 = vld [vmem:[#allocation6 + $0x8e0] sm:$0xff]
    %v446 = vld [vmem:[#allocation6 + $0x8e8] sm:$0xff]
    %v447 = vld [vmem:[#allocation6 + $0x8f0] sm:$0xff]
    %v448 = vld [vmem:[#allocation6 + $0x8f8] sm:$0xff]
    %v449 = vld [vmem:[#allocation6 + $0x900] sm:$0xff]
    %v450 = vld [vmem:[#allocation6 + $0x908] sm:$0xff]
    %v451 = vld [vmem:[#allocation6 + $0x910] sm:$0xff]
    %v452 = vld [vmem:[#allocation6 + $0x918] sm:$0xff]
    %v453 = vld [vmem:[#allocation6 + $0x920] sm:$0xff]
    %v454 = vld [vmem:[#allocation6 + $0x928] sm:$0xff]
    %v455 = vld [vmem:[#allocation6 + $0x930] sm:$0xff]
    %v456 = vld [vmem:[#allocation6 + $0x938] sm:$0xff]
    %v457 = vld [vmem:[#allocation6 + $0x940] sm:$0xff]
    %v458 = vld [vmem:[#allocation6 + $0x948] sm:$0xff]
    %v459 = vld [vmem:[#allocation6 + $0x950] sm:$0xff]
    %v460 = vld [vmem:[#allocation6 + $0x958] sm:$0xff]
    %v461 = vld [vmem:[#allocation6 + $0x960] sm:$0xff]
    %v462 = vld [vmem:[#allocation6 + $0x968] sm:$0xff]
    %v463 = vld [vmem:[#allocation6 + $0x970] sm:$0xff]
    %v464 = vld [vmem:[#allocation6 + $0x978] sm:$0xff]
    %v465 = vld [vmem:[#allocation6 + $0x980] sm:$0xff]
    %v466 = vld [vmem:[#allocation6 + $0x988] sm:$0xff]
    %v467 = vld [vmem:[#allocation6 + $0x990] sm:$0xff]
    %v468 = vld [vmem:[#allocation6 + $0x998] sm:$0xff]
    %v469 = vld [vmem:[#allocation6 + $0x9a0] sm:$0xff]
    %v470 = vld [vmem:[#allocation6 + $0x9a8] sm:$0xff]
    %v471 = vld [vmem:[#allocation6 + $0x9b0] sm:$0xff]
    %v472 = vld [vmem:[#allocation6 + $0x9b8] sm:$0xff]
    %v473 = vld [vmem:[#allocation6 + $0x9c0] sm:$0xff]
    %v474 = vld [vmem:[#allocation6 + $0x9c8] sm:$0xff]
    %v475 = vld [vmem:[#allocation6 + $0x9d0] sm:$0xff]
    %v476 = vld [vmem:[#allocation6 + $0x9d8] sm:$0xff]
    %v477 = vld [vmem:[#allocation6 + $0x9e0] sm:$0xff]
    %v478 = vld [vmem:[#allocation6 + $0x9e8] sm:$0xff]
    %v479 = vld [vmem:[#allocation6 + $0x9f0] sm:$0xff]
    %v480 = vld [vmem:[#allocation6 + $0x9f8] sm:$0xff]
    %v481 = vld [vmem:[#allocation6 + $0xa00] sm:$0xff]
    %v482 = vld [vmem:[#allocation6 + $0xa08] sm:$0xff]
    %v483 = vld [vmem:[#allocation6 + $0xa10] sm:$0xff]
    %v484 = vld [vmem:[#allocation6 + $0xa18] sm:$0xff]
    %v485 = vld [vmem:[#allocation6 + $0xa20] sm:$0xff]
    %v486 = vld [vmem:[#allocation6 + $0xa28] sm:$0xff]
    %v487 = vld [vmem:[#allocation6 + $0xa30] sm:$0xff]
    %v488 = vld [vmem:[#allocation6 + $0xa38] sm:$0xff]
    %v489 = vld [vmem:[#allocation6 + $0xa40] sm:$0xff]
    %v490 = vld [vmem:[#allocation6 + $0xa48] sm:$0xff]
    %v491 = vld [vmem:[#allocation6 + $0xa50] sm:$0xff]
    %v492 = vld [vmem:[#allocation6 + $0xa58] sm:$0xff]
    %v493 = vld [vmem:[#allocation6 + $0xa60] sm:$0xff]
    %v494 = vld [vmem:[#allocation6 + $0xa68] sm:$0xff]
    %v495 = vld [vmem:[#allocation6 + $0xa70] sm:$0xff]
    %v496 = vld [vmem:[#allocation6 + $0xa78] sm:$0xff]
    %v497 = vld [vmem:[#allocation6 + $0xa80] sm:$0xff]
    %v498 = vld [vmem:[#allocation6 + $0xa88] sm:$0xff]
    %v499 = vld [vmem:[#allocation6 + $0xa90] sm:$0xff]
    %v500 = vld [vmem:[#allocation6 + $0xa98] sm:$0xff]
    %v501 = vld [vmem:[#allocation6 + $0xaa0] sm:$0xff]
    %v502 = vld [vmem:[#allocation6 + $0xaa8] sm:$0xff]
    %v503 = vld [vmem:[#allocation6 + $0xab0] sm:$0xff]
    %v504 = vld [vmem:[#allocation6 + $0xab8] sm:$0xff]
    %v505 = vld [vmem:[#allocation6 + $0xac0] sm:$0xff]
    %v506 = vld [vmem:[#allocation6 + $0xac8] sm:$0xff]
    %v507 = vld [vmem:[#allocation6 + $0xad0] sm:$0xff]
    %v508 = vld [vmem:[#allocation6 + $0xad8] sm:$0xff]
    %v509 = vld [vmem:[#allocation6 + $0xae0] sm:$0xff]
    %v510 = vld [vmem:[#allocation6 + $0xae8] sm:$0xff]
    %v511 = vld [vmem:[#allocation6 + $0xaf0] sm:$0xff]
    %v512 = vld [vmem:[#allocation6 + $0xaf8] sm:$0xff]
    %v513 = vld [vmem:[#allocation6 + $0xb00] sm:$0xff]
    %v514 = vld [vmem:[#allocation6 + $0xb08] sm:$0xff]
    %v515 = vld [vmem:[#allocation6 + $0xb10] sm:$0xff]
    %v516 = vld [vmem:[#allocation6 + $0xb18] sm:$0xff]
    %v517 = vld [vmem:[#allocation6 + $0xb20] sm:$0xff]
    %v518 = vld [vmem:[#allocation6 + $0xb28] sm:$0xff]
    %v519 = vld [vmem:[#allocation6 + $0xb30] sm:$0xff]
    %v520 = vld [vmem:[#allocation6 + $0xb38] sm:$0xff]
    %v521 = vld [vmem:[#allocation6 + $0xb40] sm:$0xff]
    %v522 = vld [vmem:[#allocation6 + $0xb48] sm:$0xff]
    %v523 = vld [vmem:[#allocation6 + $0xb50] sm:$0xff]
    %v524 = vld [vmem:[#allocation6 + $0xb58] sm:$0xff]
    %v525 = vld [vmem:[#allocation6 + $0xb60] sm:$0xff]
    %v526 = vld [vmem:[#allocation6 + $0xb68] sm:$0xff]
    %v527 = vld [vmem:[#allocation6 + $0xb70] sm:$0xff]
    %v528 = vld [vmem:[#allocation6 + $0xb78] sm:$0xff]
    %v529 = vld [vmem:[#allocation6 + $0xb80] sm:$0xff]
    %v530 = vld [vmem:[#allocation6 + $0xb88] sm:$0xff]
    %v531 = vld [vmem:[#allocation6 + $0xb90] sm:$0xff]
    %v532 = vld [vmem:[#allocation6 + $0xb98] sm:$0xff]
    %v533 = vld [vmem:[#allocation6 + $0xba0] sm:$0xff]
    %v534 = vld [vmem:[#allocation6 + $0xba8] sm:$0xff]
    %v535 = vld [vmem:[#allocation6 + $0xbb0] sm:$0xff]
    %v536 = vld [vmem:[#allocation6 + $0xbb8] sm:$0xff]
    %v537 = vld [vmem:[#allocation6 + $0xbc0] sm:$0xff]
    %v538 = vld [vmem:[#allocation6 + $0xbc8] sm:$0xff]
    %v539 = vld [vmem:[#allocation6 + $0xbd0] sm:$0xff]
    %v540 = vld [vmem:[#allocation6 + $0xbd8] sm:$0xff]
    %v541 = vld [vmem:[#allocation6 + $0xbe0] sm:$0xff]
    %v542 = vld [vmem:[#allocation6 + $0xbe8] sm:$0xff]
    %v543 = vld [vmem:[#allocation6 + $0xbf0] sm:$0xff]
    %v544 = vld [vmem:[#allocation6 + $0xbf8] sm:$0xff]
    %v545 = vld [vmem:[#allocation6 + $0xc00] sm:$0xff]
    %v546 = vld [vmem:[#allocation6 + $0xc08] sm:$0xff]
    %v547 = vld [vmem:[#allocation6 + $0xc10] sm:$0xff]
    %v548 = vld [vmem:[#allocation6 + $0xc18] sm:$0xff]
    %v549 = vld [vmem:[#allocation6 + $0xc20] sm:$0xff]
    %v550 = vld [vmem:[#allocation6 + $0xc28] sm:$0xff]
    %v551 = vld [vmem:[#allocation6 + $0xc30] sm:$0xff]
    %v552 = vld [vmem:[#allocation6 + $0xc38] sm:$0xff]
    %v553 = vld [vmem:[#allocation8] sm:$0x1]
    %v555 = vperm.slane %v553, 0
    %582 = vst [vmem:[#allocation1] ss:$4 sm:$0xff] %v136
    %s583 = scalar_lea.vmem [#allocation1], 32
    %584 = vst [vmem:[%s583] ss:$4 sm:$0xff] %v137
    %v585 = vld.sshfl [vmem:[#allocation1] sm:$0xff pattern:$0x73625140]
    %v586 = vld.sshfl [vmem:[#allocation1 + $0x8] sm:$0xff pattern:$0x73625140]
    %v587 = vld.sshfl [vmem:[#allocation1 + $0x10] sm:$0xff pattern:$0x73625140]
    %v588 = vld.sshfl [vmem:[#allocation1 + $0x18] sm:$0xff pattern:$0x73625140]
    %v589 = vld.sshfl [vmem:[#allocation1 + $0x20] sm:$0xff pattern:$0x73625140]
    %v590 = vld.sshfl [vmem:[#allocation1 + $0x28] sm:$0xff pattern:$0x73625140]
    %v591 = vld.sshfl [vmem:[#allocation1 + $0x30] sm:$0xff pattern:$0x73625140]
    %v592 = vld.sshfl [vmem:[#allocation1 + $0x38] sm:$0xff pattern:$0x73625140]
    %593 = vst [vmem:[#allocation1] ss:$4 sm:$0xff] %v138
    %594 = vst [vmem:[%s583] ss:$4 sm:$0xff] %v139
    %v595 = vld.sshfl [vmem:[#allocation1] sm:$0xff pattern:$0x73625140]
    %v596 = vld.sshfl [vmem:[#allocation1 + $0x8] sm:$0xff pattern:$0x73625140]
    %v597 = vld.sshfl [vmem:[#allocation1 + $0x10] sm:$0xff pattern:$0x73625140]
    %v598 = vld.sshfl [vmem:[#allocation1 + $0x18] sm:$0xff pattern:$0x73625140]
    %v599 = vld.sshfl [vmem:[#allocation1 + $0x20] sm:$0xff pattern:$0x73625140]
    %v600 = vld.sshfl [vmem:[#allocation1 + $0x28] sm:$0xff pattern:$0x73625140]
    %v601 = vld.sshfl [vmem:[#allocation1 + $0x30] sm:$0xff pattern:$0x73625140]
    %v602 = vld.sshfl [vmem:[#allocation1 + $0x38] sm:$0xff pattern:$0x73625140]
    %603 = vst [vmem:[#allocation1] ss:$4 sm:$0xff] %v140
    %604 = vst [vmem:[%s583] ss:$4 sm:$0xff] %v141
    %v605 = vld.sshfl [vmem:[#allocation1] sm:$0xff pattern:$0x73625140]
    %v606 = vld.sshfl [vmem:[#allocation1 + $0x8] sm:$0xff pattern:$0x73625140]
    %v607 = vld.sshfl [vmem:[#allocation1 + $0x10] sm:$0xff pattern:$0x73625140]
    %v608 = vld.sshfl [vmem:[#allocation1 + $0x18] sm:$0xff pattern:$0x73625140]
    %v609 = vld.sshfl [vmem:[#allocation1 + $0x20] sm:$0xff pattern:$0x73625140]
    %v610 = vld.sshfl [vmem:[#allocation1 + $0x28] sm:$0xff pattern:$0x73625140]
    %v611 = vld.sshfl [vmem:[#allocation1 + $0x30] sm:$0xff pattern:$0x73625140]
    %v612 = vld.sshfl [vmem:[#allocation1 + $0x38] sm:$0xff pattern:$0x73625140]
    %613 = vst [vmem:[#allocation1] ss:$4 sm:$0xff] %v142
    %614 = vst [vmem:[%s583] ss:$4 sm:$0xff] %v143
    %v615 = vld.sshfl [vmem:[#allocation1] sm:$0xff pattern:$0x73625140]
    %v616 = vld.sshfl [vmem:[#allocation1 + $0x8] sm:$0xff pattern:$0x73625140]
    %v617 = vld.sshfl [vmem:[#allocation1 + $0x10] sm:$0xff pattern:$0x73625140]
    %v618 = vld.sshfl [vmem:[#allocation1 + $0x18] sm:$0xff pattern:$0x73625140]
    %v619 = vld.sshfl [vmem:[#allocation1 + $0x20] sm:$0xff pattern:$0x73625140]
    %v620 = vld.sshfl [vmem:[#allocation1 + $0x28] sm:$0xff pattern:$0x73625140]
    %v621 = vld.sshfl [vmem:[#allocation1 + $0x30] sm:$0xff pattern:$0x73625140]
    %v622 = vld.sshfl [vmem:[#allocation1 + $0x38] sm:$0xff pattern:$0x73625140]
    %623 = vst [vmem:[#allocation1] ss:$4 sm:$0xff] %v144
    %624 = vst [vmem:[%s583] ss:$4 sm:$0xff] %v145
    %v625 = vld.sshfl [vmem:[#allocation1] sm:$0xff pattern:$0x73625140]
    %v626 = vld.sshfl [vmem:[#allocation1 + $0x8] sm:$0xff pattern:$0x73625140]
    %v627 = vld.sshfl [vmem:[#allocation1 + $0x10] sm:$0xff pattern:$0x73625140]
    %v628 = vld.sshfl [vmem:[#allocation1 + $0x18] sm:$0xff pattern:$0x73625140]
    %v629 = vld.sshfl [vmem:[#allocation1 + $0x20] sm:$0xff pattern:$0x73625140]
    %v630 = vld.sshfl [vmem:[#allocation1 + $0x28] sm:$0xff pattern:$0x73625140]
    %v631 = vld.sshfl [vmem:[#allocation1 + $0x30] sm:$0xff pattern:$0x73625140]
    %v632 = vld.sshfl [vmem:[#allocation1 + $0x38] sm:$0xff pattern:$0x73625140]
    %633 = vst [vmem:[#allocation1] ss:$4 sm:$0xff] %v146
    %634 = vst [vmem:[%s583] ss:$4 sm:$0xff] %v147
    %v635 = vld.sshfl [vmem:[#allocation1] sm:$0xff pattern:$0x73625140]
    %v636 = vld.sshfl [vmem:[#allocation1 + $0x8] sm:$0xff pattern:$0x73625140]
    %v637 = vld.sshfl [vmem:[#allocation1 + $0x10] sm:$0xff pattern:$0x73625140]
    %v638 = vld.sshfl [vmem:[#allocation1 + $0x18] sm:$0xff pattern:$0x73625140]
    %v639 = vld.sshfl [vmem:[#allocation1 + $0x20] sm:$0xff pattern:$0x73625140]
    %v640 = vld.sshfl [vmem:[#allocation1 + $0x28] sm:$0xff pattern:$0x73625140]
    %v641 = vld.sshfl [vmem:[#allocation1 + $0x30] sm:$0xff pattern:$0x73625140]
    %v642 = vld.sshfl [vmem:[#allocation1 + $0x38] sm:$0xff pattern:$0x73625140]
    %643 = vst [vmem:[#allocation1] ss:$4 sm:$0xff] %v148
    %644 = vst [vmem:[%s583] ss:$4 sm:$0xff] %v149
    %v645 = vld.sshfl [vmem:[#allocation1] sm:$0xff pattern:$0x73625140]
    %v646 = vld.sshfl [vmem:[#allocation1 + $0x8] sm:$0xff pattern:$0x73625140]
    %v647 = vld.sshfl [vmem:[#allocation1 + $0x10] sm:$0xff pattern:$0x73625140]
    %v648 = vld.sshfl [vmem:[#allocation1 + $0x18] sm:$0xff pattern:$0x73625140]
    %v649 = vld.sshfl [vmem:[#allocation1 + $0x20] sm:$0xff pattern:$0x73625140]
    %v650 = vld.sshfl [vmem:[#allocation1 + $0x28] sm:$0xff pattern:$0x73625140]
    %v651 = vld.sshfl [vmem:[#allocation1 + $0x30] sm:$0xff pattern:$0x73625140]
    %v652 = vld.sshfl [vmem:[#allocation1 + $0x38] sm:$0xff pattern:$0x73625140]
    %653 = vst [vmem:[#allocation1] ss:$4 sm:$0xff] %v150
    %654 = vst [vmem:[%s583] ss:$4 sm:$0xff] %v151
    %v655 = vld.sshfl [vmem:[#allocation1] sm:$0xff pattern:$0x73625140]
    %v656 = vld.sshfl [vmem:[#allocation1 + $0x8] sm:$0xff pattern:$0x73625140]
    %v657 = vld.sshfl [vmem:[#allocation1 + $0x10] sm:$0xff pattern:$0x73625140]
    %v658 = vld.sshfl [vmem:[#allocation1 + $0x18] sm:$0xff pattern:$0x73625140]
    %v659 = vld.sshfl [vmem:[#allocation1 + $0x20] sm:$0xff pattern:$0x73625140]
    %v660 = vld.sshfl [vmem:[#allocation1 + $0x28] sm:$0xff pattern:$0x73625140]
    %v661 = vld.sshfl [vmem:[#allocation1 + $0x30] sm:$0xff pattern:$0x73625140]
    %v662 = vld.sshfl [vmem:[#allocation1 + $0x38] sm:$0xff pattern:$0x73625140]
    %663 = vst [vmem:[#allocation1] ss:$4 sm:$0xff] %v152
    %664 = vst [vmem:[%s583] ss:$4 sm:$0xff] %v153
    %v665 = vld.sshfl [vmem:[#allocation1] sm:$0xff pattern:$0x73625140]
    %v666 = vld.sshfl [vmem:[#allocation1 + $0x8] sm:$0xff pattern:$0x73625140]
    %v667 = vld.sshfl [vmem:[#allocation1 + $0x10] sm:$0xff pattern:$0x73625140]
    %v668 = vld.sshfl [vmem:[#allocation1 + $0x18] sm:$0xff pattern:$0x73625140]
    %v669 = vld.sshfl [vmem:[#allocation1 + $0x20] sm:$0xff pattern:$0x73625140]
    %v670 = vld.sshfl [vmem:[#allocation1 + $0x28] sm:$0xff pattern:$0x73625140]
    %v671 = vld.sshfl [vmem:[#allocation1 + $0x30] sm:$0xff pattern:$0x73625140]
    %v672 = vld.sshfl [vmem:[#allocation1 + $0x38] sm:$0xff pattern:$0x73625140]
    %673 = vst [vmem:[#allocation1] ss:$4 sm:$0xff] %v154
    %674 = vst [vmem:[%s583] ss:$4 sm:$0xff] %v155
    %v675 = vld.sshfl [vmem:[#allocation1] sm:$0xff pattern:$0x73625140]
    %v676 = vld.sshfl [vmem:[#allocation1 + $0x8] sm:$0xff pattern:$0x73625140]
    %v677 = vld.sshfl [vmem:[#allocation1 + $0x10] sm:$0xff pattern:$0x73625140]
    %v678 = vld.sshfl [vmem:[#allocation1 + $0x18] sm:$0xff pattern:$0x73625140]
    %v679 = vld.sshfl [vmem:[#allocation1 + $0x20] sm:$0xff pattern:$0x73625140]
    %v680 = vld.sshfl [vmem:[#allocation1 + $0x28] sm:$0xff pattern:$0x73625140]
    %v681 = vld.sshfl [vmem:[#allocation1 + $0x30] sm:$0xff pattern:$0x73625140]
    %v682 = vld.sshfl [vmem:[#allocation1 + $0x38] sm:$0xff pattern:$0x73625140]
    %683 = vst [vmem:[#allocation1] ss:$4 sm:$0xff] %v156
    %684 = vst [vmem:[%s583] ss:$4 sm:$0xff] %v157
    %v685 = vld.sshfl [vmem:[#allocation1] sm:$0xff pattern:$0x73625140]
    %v686 = vld.sshfl [vmem:[#allocation1 + $0x8] sm:$0xff pattern:$0x73625140]
    %v687 = vld.sshfl [vmem:[#allocation1 + $0x10] sm:$0xff pattern:$0x73625140]
    %v688 = vld.sshfl [vmem:[#allocation1 + $0x18] sm:$0xff pattern:$0x73625140]
    %v689 = vld.sshfl [vmem:[#allocation1 + $0x20] sm:$0xff pattern:$0x73625140]
    %v690 = vld.sshfl [vmem:[#allocation1 + $0x28] sm:$0xff pattern:$0x73625140]
    %v691 = vld.sshfl [vmem:[#allocation1 + $0x30] sm:$0xff pattern:$0x73625140]
    %v692 = vld.sshfl [vmem:[#allocation1 + $0x38] sm:$0xff pattern:$0x73625140]
    %693 = vst [vmem:[#allocation1] ss:$4 sm:$0xff] %v158
    %694 = vst [vmem:[%s583] ss:$4 sm:$0xff] %v159
    %v695 = vld.sshfl [vmem:[#allocation1] sm:$0xff pattern:$0x73625140]
    %v696 = vld.sshfl [vmem:[#allocation1 + $0x8] sm:$0xff pattern:$0x73625140]
    %v697 = vld.sshfl [vmem:[#allocation1 + $0x10] sm:$0xff pattern:$0x73625140]
    %v698 = vld.sshfl [vmem:[#allocation1 + $0x18] sm:$0xff pattern:$0x73625140]
    %v699 = vld.sshfl [vmem:[#allocation1 + $0x20] sm:$0xff pattern:$0x73625140]
    %v700 = vld.sshfl [vmem:[#allocation1 + $0x28] sm:$0xff pattern:$0x73625140]
    %v701 = vld.sshfl [vmem:[#allocation1 + $0x30] sm:$0xff pattern:$0x73625140]
    %v702 = vld.sshfl [vmem:[#allocation1 + $0x38] sm:$0xff pattern:$0x73625140]
    %703 = vst [vmem:[#allocation1] ss:$4 sm:$0xff] %v160
    %v704 = vld.sshfl [vmem:[#allocation1] sm:$0xff pattern:$0x73625140]
    %v705 = vld.sshfl [vmem:[#allocation1 + $0x8] sm:$0xff pattern:$0x73625140]
    %804 = vmatpush.xpose.msra.mxu0 0.0
    %805 = vmatpush.xpose.msra.mxu0 0.0
    %806 = vmatpush.xpose.msra.mxu0 0.0
    %807 = vmatpush.xpose.msra.mxu0 0.0
    %808 = vmatpush.xpose.msra.mxu0 0.0
    %809 = vmatpush.xpose.msra.mxu0 0.0
    %810 = vmatpush.xpose.msra.mxu0 0.0
    %811 = vmatpush.xpose.msra.mxu0 0.0
    %812 = vmatpush.xpose.msra.mxu0 0.0
    %813 = vmatpush.xpose.msra.mxu0 0.0
    %814 = vmatpush.xpose.msra.mxu0 0.0
    %815 = vmatpush.xpose.msra.mxu0 0.0
    %816 = vmatpush.xpose.msra.mxu0 %v455
    %817 = vmatpush.xpose.msra.mxu0 %v357
    %818 = vmatpush.xpose.msra.mxu0 %v259
    %819 = vmatpush.xpose.msra.mxu0 %v161
    %820 = vmatmul.f32.gmra.mxu0 %v585
    %v821 = vpop.f32.mrf.mxu0
    %v822 = vadd.f32 %v555, %v821
    %823 = vdwg.mxu0
    %824 = vmatpush.xpose.msra.mxu0 0.0
    %825 = vmatpush.xpose.msra.mxu0 0.0
    %826 = vmatpush.xpose.msra.mxu0 0.0
    %827 = vmatpush.xpose.msra.mxu0 0.0
    %828 = vmatpush.xpose.msra.mxu0 0.0
    %829 = vmatpush.xpose.msra.mxu0 0.0
    %830 = vmatpush.xpose.msra.mxu0 0.0
    %831 = vmatpush.xpose.msra.mxu0 0.0
    %832 = vmatpush.xpose.msra.mxu0 0.0
    %833 = vmatpush.xpose.msra.mxu0 0.0
    %834 = vmatpush.xpose.msra.mxu0 0.0
    %835 = vmatpush.xpose.msra.mxu0 0.0
    %836 = vmatpush.xpose.msra.mxu0 %v456
    %837 = vmatpush.xpose.msra.mxu0 %v358
    %838 = vmatpush.xpose.msra.mxu0 %v260
    %839 = vmatpush.xpose.msra.mxu0 %v162
    %840 = vmatmul.f32.gmra.mxu0 %v586
    %v841 = vpop.f32.mrf.mxu0
    %v842 = vadd.f32 %v822, %v841
    %843 = vdwg.mxu0
    %844 = vmatpush.xpose.msra.mxu0 0.0
    %845 = vmatpush.xpose.msra.mxu0 0.0
    %846 = vmatpush.xpose.msra.mxu0 0.0
    %847 = vmatpush.xpose.msra.mxu0 0.0
    %848 = vmatpush.xpose.msra.mxu0 0.0
    %849 = vmatpush.xpose.msra.mxu0 0.0
    %850 = vmatpush.xpose.msra.mxu0 0.0
    %851 = vmatpush.xpose.msra.mxu0 0.0
    %852 = vmatpush.xpose.msra.mxu0 0.0
    %853 = vmatpush.xpose.msra.mxu0 0.0
    %854 = vmatpush.xpose.msra.mxu0 0.0
    %855 = vmatpush.xpose.msra.mxu0 0.0
    %856 = vmatpush.xpose.msra.mxu0 %v457
    %857 = vmatpush.xpose.msra.mxu0 %v359
    %858 = vmatpush.xpose.msra.mxu0 %v261
    %859 = vmatpush.xpose.msra.mxu0 %v163
    %860 = vmatmul.f32.gmra.mxu0 %v587
    %v861 = vpop.f32.mrf.mxu0
    %v862 = vadd.f32 %v842, %v861
    %863 = vdwg.mxu0
    %864 = vmatpush.xpose.msra.mxu0 0.0
    %865 = vmatpush.xpose.msra.mxu0 0.0
    %866 = vmatpush.xpose.msra.mxu0 0.0
    %867 = vmatpush.xpose.msra.mxu0 0.0
    %868 = vmatpush.xpose.msra.mxu0 0.0
    %869 = vmatpush.xpose.msra.mxu0 0.0
    %870 = vmatpush.xpose.msra.mxu0 0.0
    %871 = vmatpush.xpose.msra.mxu0 0.0
    %872 = vmatpush.xpose.msra.mxu0 0.0
    %873 = vmatpush.xpose.msra.mxu0 0.0
    %874 = vmatpush.xpose.msra.mxu0 0.0
    %875 = vmatpush.xpose.msra.mxu0 0.0
    %876 = vmatpush.xpose.msra.mxu0 %v458
    %877 = vmatpush.xpose.msra.mxu0 %v360
    %878 = vmatpush.xpose.msra.mxu0 %v262
    %879 = vmatpush.xpose.msra.mxu0 %v164
    %880 = vmatmul.f32.gmra.mxu0 %v588
    %v881 = vpop.f32.mrf.mxu0
    %v882 = vadd.f32 %v862, %v881
    %883 = vdwg.mxu0
    %884 = vmatpush.xpose.msra.mxu0 0.0
    %885 = vmatpush.xpose.msra.mxu0 0.0
    %886 = vmatpush.xpose.msra.mxu0 0.0
    %887 = vmatpush.xpose.msra.mxu0 0.0
    %888 = vmatpush.xpose.msra.mxu0 0.0
    %889 = vmatpush.xpose.msra.mxu0 0.0
    %890 = vmatpush.xpose.msra.mxu0 0.0
    %891 = vmatpush.xpose.msra.mxu0 0.0
    %892 = vmatpush.xpose.msra.mxu0 0.0
    %893 = vmatpush.xpose.msra.mxu0 0.0
    %894 = vmatpush.xpose.msra.mxu0 0.0
    %895 = vmatpush.xpose.msra.mxu0 0.0
    %896 = vmatpush.xpose.msra.mxu0 %v459
    %897 = vmatpush.xpose.msra.mxu0 %v361
    %898 = vmatpush.xpose.msra.mxu0 %v263
    %899 = vmatpush.xpose.msra.mxu0 %v165
    %900 = vmatmul.f32.gmra.mxu0 %v589
    %v901 = vpop.f32.mrf.mxu0
    %v902 = vadd.f32 %v882, %v901
    %903 = vdwg.mxu0
    %904 = vmatpush.xpose.msra.mxu0 0.0
    %905 = vmatpush.xpose.msra.mxu0 0.0
    %906 = vmatpush.xpose.msra.mxu0 0.0
    %907 = vmatpush.xpose.msra.mxu0 0.0
    %908 = vmatpush.xpose.msra.mxu0 0.0
    %909 = vmatpush.xpose.msra.mxu0 0.0
    %910 = vmatpush.xpose.msra.mxu0 0.0
    %911 = vmatpush.xpose.msra.mxu0 0.0
    %912 = vmatpush.xpose.msra.mxu0 0.0
    %913 = vmatpush.xpose.msra.mxu0 0.0
    %914 = vmatpush.xpose.msra.mxu0 0.0
    %915 = vmatpush.xpose.msra.mxu0 0.0
    %916 = vmatpush.xpose.msra.mxu0 %v460
    %917 = vmatpush.xpose.msra.mxu0 %v362
    %918 = vmatpush.xpose.msra.mxu0 %v264
    %919 = vmatpush.xpose.msra.mxu0 %v166
    %920 = vmatmul.f32.gmra.mxu0 %v590
    %v921 = vpop.f32.mrf.mxu0
    %v922 = vadd.f32 %v902, %v921
    %923 = vdwg.mxu0
    %924 = vmatpush.xpose.msra.mxu0 0.0
    %925 = vmatpush.xpose.msra.mxu0 0.0
    %926 = vmatpush.xpose.msra.mxu0 0.0
    %927 = vmatpush.xpose.msra.mxu0 0.0
    %928 = vmatpush.xpose.msra.mxu0 0.0
    %929 = vmatpush.xpose.msra.mxu0 0.0
    %930 = vmatpush.xpose.msra.mxu0 0.0
    %931 = vmatpush.xpose.msra.mxu0 0.0
    %932 = vmatpush.xpose.msra.mxu0 0.0
    %933 = vmatpush.xpose.msra.mxu0 0.0
    %934 = vmatpush.xpose.msra.mxu0 0.0
    %935 = vmatpush.xpose.msra.mxu0 0.0
    %936 = vmatpush.xpose.msra.mxu0 %v461
    %937 = vmatpush.xpose.msra.mxu0 %v363
    %938 = vmatpush.xpose.msra.mxu0 %v265
    %939 = vmatpush.xpose.msra.mxu0 %v167
    %940 = vmatmul.f32.gmra.mxu0 %v591
    %v941 = vpop.f32.mrf.mxu0
    %v942 = vadd.f32 %v922, %v941
    %943 = vdwg.mxu0
    %944 = vmatpush.xpose.msra.mxu0 0.0
    %945 = vmatpush.xpose.msra.mxu0 0.0
    %946 = vmatpush.xpose.msra.mxu0 0.0
    %947 = vmatpush.xpose.msra.mxu0 0.0
    %948 = vmatpush.xpose.msra.mxu0 0.0
    %949 = vmatpush.xpose.msra.mxu0 0.0
    %950 = vmatpush.xpose.msra.mxu0 0.0
    %951 = vmatpush.xpose.msra.mxu0 0.0
    %952 = vmatpush.xpose.msra.mxu0 0.0
    %953 = vmatpush.xpose.msra.mxu0 0.0
    %954 = vmatpush.xpose.msra.mxu0 0.0
    %955 = vmatpush.xpose.msra.mxu0 0.0
    %956 = vmatpush.xpose.msra.mxu0 %v462
    %957 = vmatpush.xpose.msra.mxu0 %v364
    %958 = vmatpush.xpose.msra.mxu0 %v266
    %959 = vmatpush.xpose.msra.mxu0 %v168
    %960 = vmatmul.f32.gmra.mxu0 %v592
    %v961 = vpop.f32.mrf.mxu0
    %v962 = vadd.f32 %v942, %v961
    %963 = vdwg.mxu0
    %964 = vmatpush.xpose.msra.mxu0 0.0
    %965 = vmatpush.xpose.msra.mxu0 0.0
    %966 = vmatpush.xpose.msra.mxu0 0.0
    %967 = vmatpush.xpose.msra.mxu0 0.0
    %968 = vmatpush.xpose.msra.mxu0 0.0
    %969 = vmatpush.xpose.msra.mxu0 0.0
    %970 = vmatpush.xpose.msra.mxu0 0.0
    %971 = vmatpush.xpose.msra.mxu0 0.0
    %972 = vmatpush.xpose.msra.mxu0 0.0
    %973 = vmatpush.xpose.msra.mxu0 0.0
    %974 = vmatpush.xpose.msra.mxu0 0.0
    %975 = vmatpush.xpose.msra.mxu0 0.0
    %976 = vmatpush.xpose.msra.mxu0 %v463
    %977 = vmatpush.xpose.msra.mxu0 %v365
    %978 = vmatpush.xpose.msra.mxu0 %v267
    %979 = vmatpush.xpose.msra.mxu0 %v169
    %980 = vmatmul.f32.gmra.mxu0 %v595
    %v981 = vpop.f32.mrf.mxu0
    %v982 = vadd.f32 %v962, %v981
    %983 = vdwg.mxu0
    %984 = vmatpush.xpose.msra.mxu0 0.0
    %985 = vmatpush.xpose.msra.mxu0 0.0
    %986 = vmatpush.xpose.msra.mxu0 0.0
    %987 = vmatpush.xpose.msra.mxu0 0.0
    %988 = vmatpush.xpose.msra.mxu0 0.0
    %989 = vmatpush.xpose.msra.mxu0 0.0
    %990 = vmatpush.xpose.msra.mxu0 0.0
    %991 = vmatpush.xpose.msra.mxu0 0.0
    %992 = vmatpush.xpose.msra.mxu0 0.0
    %993 = vmatpush.xpose.msra.mxu0 0.0
    %994 = vmatpush.xpose.msra.mxu0 0.0
    %995 = vmatpush.xpose.msra.mxu0 0.0
    %996 = vmatpush.xpose.msra.mxu0 %v464
    %997 = vmatpush.xpose.msra.mxu0 %v366
    %998 = vmatpush.xpose.msra.mxu0 %v268
    %999 = vmatpush.xpose.msra.mxu0 %v170
    %1000 = vmatmul.f32.gmra.mxu0 %v596
    %v1001 = vpop.f32.mrf.mxu0
    %v1002 = vadd.f32 %v982, %v1001
    %1003 = vdwg.mxu0
    %1004 = vmatpush.xpose.msra.mxu0 0.0
    %1005 = vmatpush.xpose.msra.mxu0 0.0
    %1006 = vmatpush.xpose.msra.mxu0 0.0
    %1007 = vmatpush.xpose.msra.mxu0 0.0
    %1008 = vmatpush.xpose.msra.mxu0 0.0
    %1009 = vmatpush.xpose.msra.mxu0 0.0
    %1010 = vmatpush.xpose.msra.mxu0 0.0
    %1011 = vmatpush.xpose.msra.mxu0 0.0
    %1012 = vmatpush.xpose.msra.mxu0 0.0
    %1013 = vmatpush.xpose.msra.mxu0 0.0
    %1014 = vmatpush.xpose.msra.mxu0 0.0
    %1015 = vmatpush.xpose.msra.mxu0 0.0
    %1016 = vmatpush.xpose.msra.mxu0 %v465
    %1017 = vmatpush.xpose.msra.mxu0 %v367
    %1018 = vmatpush.xpose.msra.mxu0 %v269
    %1019 = vmatpush.xpose.msra.mxu0 %v171
    %1020 = vmatmul.f32.gmra.mxu0 %v597
    %v1021 = vpop.f32.mrf.mxu0
    %v1022 = vadd.f32 %v1002, %v1021
    %1023 = vdwg.mxu0
    %1024 = vmatpush.xpose.msra.mxu0 0.0
    %1025 = vmatpush.xpose.msra.mxu0 0.0
    %1026 = vmatpush.xpose.msra.mxu0 0.0
    %1027 = vmatpush.xpose.msra.mxu0 0.0
    %1028 = vmatpush.xpose.msra.mxu0 0.0
    %1029 = vmatpush.xpose.msra.mxu0 0.0
    %1030 = vmatpush.xpose.msra.mxu0 0.0
    %1031 = vmatpush.xpose.msra.mxu0 0.0
    %1032 = vmatpush.xpose.msra.mxu0 0.0
    %1033 = vmatpush.xpose.msra.mxu0 0.0
    %1034 = vmatpush.xpose.msra.mxu0 0.0
    %1035 = vmatpush.xpose.msra.mxu0 0.0
    %1036 = vmatpush.xpose.msra.mxu0 %v466
    %1037 = vmatpush.xpose.msra.mxu0 %v368
    %1038 = vmatpush.xpose.msra.mxu0 %v270
    %1039 = vmatpush.xpose.msra.mxu0 %v172
    %1040 = vmatmul.f32.gmra.mxu0 %v598
    %v1041 = vpop.f32.mrf.mxu0
    %v1042 = vadd.f32 %v1022, %v1041
    %1043 = vdwg.mxu0
    %1044 = vmatpush.xpose.msra.mxu0 0.0
    %1045 = vmatpush.xpose.msra.mxu0 0.0
    %1046 = vmatpush.xpose.msra.mxu0 0.0
    %1047 = vmatpush.xpose.msra.mxu0 0.0
    %1048 = vmatpush.xpose.msra.mxu0 0.0
    %1049 = vmatpush.xpose.msra.mxu0 0.0
    %1050 = vmatpush.xpose.msra.mxu0 0.0
    %1051 = vmatpush.xpose.msra.mxu0 0.0
    %1052 = vmatpush.xpose.msra.mxu0 0.0
    %1053 = vmatpush.xpose.msra.mxu0 0.0
    %1054 = vmatpush.xpose.msra.mxu0 0.0
    %1055 = vmatpush.xpose.msra.mxu0 0.0
    %1056 = vmatpush.xpose.msra.mxu0 %v467
    %1057 = vmatpush.xpose.msra.mxu0 %v369
    %1058 = vmatpush.xpose.msra.mxu0 %v271
    %1059 = vmatpush.xpose.msra.mxu0 %v173
    %1060 = vmatmul.f32.gmra.mxu0 %v599
    %v1061 = vpop.f32.mrf.mxu0
    %v1062 = vadd.f32 %v1042, %v1061
    %1063 = vdwg.mxu0
    %1064 = vmatpush.xpose.msra.mxu0 0.0
    %1065 = vmatpush.xpose.msra.mxu0 0.0
    %1066 = vmatpush.xpose.msra.mxu0 0.0
    %1067 = vmatpush.xpose.msra.mxu0 0.0
    %1068 = vmatpush.xpose.msra.mxu0 0.0
    %1069 = vmatpush.xpose.msra.mxu0 0.0
    %1070 = vmatpush.xpose.msra.mxu0 0.0
    %1071 = vmatpush.xpose.msra.mxu0 0.0
    %1072 = vmatpush.xpose.msra.mxu0 0.0
    %1073 = vmatpush.xpose.msra.mxu0 0.0
    %1074 = vmatpush.xpose.msra.mxu0 0.0
    %1075 = vmatpush.xpose.msra.mxu0 0.0
    %1076 = vmatpush.xpose.msra.mxu0 %v468
    %1077 = vmatpush.xpose.msra.mxu0 %v370
    %1078 = vmatpush.xpose.msra.mxu0 %v272
    %1079 = vmatpush.xpose.msra.mxu0 %v174
    %1080 = vmatmul.f32.gmra.mxu0 %v600
    %v1081 = vpop.f32.mrf.mxu0
    %v1082 = vadd.f32 %v1062, %v1081
    %1083 = vdwg.mxu0
    %1084 = vmatpush.xpose.msra.mxu0 0.0
    %1085 = vmatpush.xpose.msra.mxu0 0.0
    %1086 = vmatpush.xpose.msra.mxu0 0.0
    %1087 = vmatpush.xpose.msra.mxu0 0.0
    %1088 = vmatpush.xpose.msra.mxu0 0.0
    %1089 = vmatpush.xpose.msra.mxu0 0.0
    %1090 = vmatpush.xpose.msra.mxu0 0.0
    %1091 = vmatpush.xpose.msra.mxu0 0.0
    %1092 = vmatpush.xpose.msra.mxu0 0.0
    %1093 = vmatpush.xpose.msra.mxu0 0.0
    %1094 = vmatpush.xpose.msra.mxu0 0.0
    %1095 = vmatpush.xpose.msra.mxu0 0.0
    %1096 = vmatpush.xpose.msra.mxu0 %v469
    %1097 = vmatpush.xpose.msra.mxu0 %v371
    %1098 = vmatpush.xpose.msra.mxu0 %v273
    %1099 = vmatpush.xpose.msra.mxu0 %v175
    %1100 = vmatmul.f32.gmra.mxu0 %v601
    %v1101 = vpop.f32.mrf.mxu0
    %v1102 = vadd.f32 %v1082, %v1101
    %1103 = vdwg.mxu0
    %1104 = vmatpush.xpose.msra.mxu0 0.0
    %1105 = vmatpush.xpose.msra.mxu0 0.0
    %1106 = vmatpush.xpose.msra.mxu0 0.0
    %1107 = vmatpush.xpose.msra.mxu0 0.0
    %1108 = vmatpush.xpose.msra.mxu0 0.0
    %1109 = vmatpush.xpose.msra.mxu0 0.0
    %1110 = vmatpush.xpose.msra.mxu0 0.0
    %1111 = vmatpush.xpose.msra.mxu0 0.0
    %1112 = vmatpush.xpose.msra.mxu0 0.0
    %1113 = vmatpush.xpose.msra.mxu0 0.0
    %1114 = vmatpush.xpose.msra.mxu0 0.0
    %1115 = vmatpush.xpose.msra.mxu0 0.0
    %1116 = vmatpush.xpose.msra.mxu0 %v470
    %1117 = vmatpush.xpose.msra.mxu0 %v372
    %1118 = vmatpush.xpose.msra.mxu0 %v274
    %1119 = vmatpush.xpose.msra.mxu0 %v176
    %1120 = vmatmul.f32.gmra.mxu0 %v602
    %v1121 = vpop.f32.mrf.mxu0
    %v1122 = vadd.f32 %v1102, %v1121
    %1123 = vdwg.mxu0
    %1124 = vmatpush.xpose.msra.mxu0 0.0
    %1125 = vmatpush.xpose.msra.mxu0 0.0
    %1126 = vmatpush.xpose.msra.mxu0 0.0
    %1127 = vmatpush.xpose.msra.mxu0 0.0
    %1128 = vmatpush.xpose.msra.mxu0 0.0
    %1129 = vmatpush.xpose.msra.mxu0 0.0
    %1130 = vmatpush.xpose.msra.mxu0 0.0
    %1131 = vmatpush.xpose.msra.mxu0 0.0
    %1132 = vmatpush.xpose.msra.mxu0 0.0
    %1133 = vmatpush.xpose.msra.mxu0 0.0
    %1134 = vmatpush.xpose.msra.mxu0 0.0
    %1135 = vmatpush.xpose.msra.mxu0 0.0
    %1136 = vmatpush.xpose.msra.mxu0 %v471
    %1137 = vmatpush.xpose.msra.mxu0 %v373
    %1138 = vmatpush.xpose.msra.mxu0 %v275
    %1139 = vmatpush.xpose.msra.mxu0 %v177
    %1140 = vmatmul.f32.gmra.mxu0 %v605
    %v1141 = vpop.f32.mrf.mxu0
    %v1142 = vadd.f32 %v1122, %v1141
    %1143 = vdwg.mxu0
    %1144 = vmatpush.xpose.msra.mxu0 0.0
    %1145 = vmatpush.xpose.msra.mxu0 0.0
    %1146 = vmatpush.xpose.msra.mxu0 0.0
    %1147 = vmatpush.xpose.msra.mxu0 0.0
    %1148 = vmatpush.xpose.msra.mxu0 0.0
    %1149 = vmatpush.xpose.msra.mxu0 0.0
    %1150 = vmatpush.xpose.msra.mxu0 0.0
    %1151 = vmatpush.xpose.msra.mxu0 0.0
    %1152 = vmatpush.xpose.msra.mxu0 0.0
    %1153 = vmatpush.xpose.msra.mxu0 0.0
    %1154 = vmatpush.xpose.msra.mxu0 0.0
    %1155 = vmatpush.xpose.msra.mxu0 0.0
    %1156 = vmatpush.xpose.msra.mxu0 %v472
    %1157 = vmatpush.xpose.msra.mxu0 %v374
    %1158 = vmatpush.xpose.msra.mxu0 %v276
    %1159 = vmatpush.xpose.msra.mxu0 %v178
    %1160 = vmatmul.f32.gmra.mxu0 %v606
    %v1161 = vpop.f32.mrf.mxu0
    %v1162 = vadd.f32 %v1142, %v1161
    %1163 = vdwg.mxu0
    %1164 = vmatpush.xpose.msra.mxu0 0.0
    %1165 = vmatpush.xpose.msra.mxu0 0.0
    %1166 = vmatpush.xpose.msra.mxu0 0.0
    %1167 = vmatpush.xpose.msra.mxu0 0.0
    %1168 = vmatpush.xpose.msra.mxu0 0.0
    %1169 = vmatpush.xpose.msra.mxu0 0.0
    %1170 = vmatpush.xpose.msra.mxu0 0.0
    %1171 = vmatpush.xpose.msra.mxu0 0.0
    %1172 = vmatpush.xpose.msra.mxu0 0.0
    %1173 = vmatpush.xpose.msra.mxu0 0.0
    %1174 = vmatpush.xpose.msra.mxu0 0.0
    %1175 = vmatpush.xpose.msra.mxu0 0.0
    %1176 = vmatpush.xpose.msra.mxu0 %v473
    %1177 = vmatpush.xpose.msra.mxu0 %v375
    %1178 = vmatpush.xpose.msra.mxu0 %v277
    %1179 = vmatpush.xpose.msra.mxu0 %v179
    %1180 = vmatmul.f32.gmra.mxu0 %v607
    %v1181 = vpop.f32.mrf.mxu0
    %v1182 = vadd.f32 %v1162, %v1181
    %1183 = vdwg.mxu0
    %1184 = vmatpush.xpose.msra.mxu0 0.0
    %1185 = vmatpush.xpose.msra.mxu0 0.0
    %1186 = vmatpush.xpose.msra.mxu0 0.0
    %1187 = vmatpush.xpose.msra.mxu0 0.0
    %1188 = vmatpush.xpose.msra.mxu0 0.0
    %1189 = vmatpush.xpose.msra.mxu0 0.0
    %1190 = vmatpush.xpose.msra.mxu0 0.0
    %1191 = vmatpush.xpose.msra.mxu0 0.0
    %1192 = vmatpush.xpose.msra.mxu0 0.0
    %1193 = vmatpush.xpose.msra.mxu0 0.0
    %1194 = vmatpush.xpose.msra.mxu0 0.0
    %1195 = vmatpush.xpose.msra.mxu0 0.0
    %1196 = vmatpush.xpose.msra.mxu0 %v474
    %1197 = vmatpush.xpose.msra.mxu0 %v376
    %1198 = vmatpush.xpose.msra.mxu0 %v278
    %1199 = vmatpush.xpose.msra.mxu0 %v180
    %1200 = vmatmul.f32.gmra.mxu0 %v608
    %v1201 = vpop.f32.mrf.mxu0
    %v1202 = vadd.f32 %v1182, %v1201
    %1203 = vdwg.mxu0
    %1204 = vmatpush.xpose.msra.mxu0 0.0
    %1205 = vmatpush.xpose.msra.mxu0 0.0
    %1206 = vmatpush.xpose.msra.mxu0 0.0
    %1207 = vmatpush.xpose.msra.mxu0 0.0
    %1208 = vmatpush.xpose.msra.mxu0 0.0
    %1209 = vmatpush.xpose.msra.mxu0 0.0
    %1210 = vmatpush.xpose.msra.mxu0 0.0
    %1211 = vmatpush.xpose.msra.mxu0 0.0
    %1212 = vmatpush.xpose.msra.mxu0 0.0
    %1213 = vmatpush.xpose.msra.mxu0 0.0
    %1214 = vmatpush.xpose.msra.mxu0 0.0
    %1215 = vmatpush.xpose.msra.mxu0 0.0
    %1216 = vmatpush.xpose.msra.mxu0 %v475
    %1217 = vmatpush.xpose.msra.mxu0 %v377
    %1218 = vmatpush.xpose.msra.mxu0 %v279
    %1219 = vmatpush.xpose.msra.mxu0 %v181
    %1220 = vmatmul.f32.gmra.mxu0 %v609
    %v1221 = vpop.f32.mrf.mxu0
    %v1222 = vadd.f32 %v1202, %v1221
    %1223 = vdwg.mxu0
    %1224 = vmatpush.xpose.msra.mxu0 0.0
    %1225 = vmatpush.xpose.msra.mxu0 0.0
    %1226 = vmatpush.xpose.msra.mxu0 0.0
    %1227 = vmatpush.xpose.msra.mxu0 0.0
    %1228 = vmatpush.xpose.msra.mxu0 0.0
    %1229 = vmatpush.xpose.msra.mxu0 0.0
    %1230 = vmatpush.xpose.msra.mxu0 0.0
    %1231 = vmatpush.xpose.msra.mxu0 0.0
    %1232 = vmatpush.xpose.msra.mxu0 0.0
    %1233 = vmatpush.xpose.msra.mxu0 0.0
    %1234 = vmatpush.xpose.msra.mxu0 0.0
    %1235 = vmatpush.xpose.msra.mxu0 0.0
    %1236 = vmatpush.xpose.msra.mxu0 %v476
    %1237 = vmatpush.xpose.msra.mxu0 %v378
    %1238 = vmatpush.xpose.msra.mxu0 %v280
    %1239 = vmatpush.xpose.msra.mxu0 %v182
    %1240 = vmatmul.f32.gmra.mxu0 %v610
    %v1241 = vpop.f32.mrf.mxu0
    %v1242 = vadd.f32 %v1222, %v1241
    %1243 = vdwg.mxu0
    %1244 = vmatpush.xpose.msra.mxu0 0.0
    %1245 = vmatpush.xpose.msra.mxu0 0.0
    %1246 = vmatpush.xpose.msra.mxu0 0.0
    %1247 = vmatpush.xpose.msra.mxu0 0.0
    %1248 = vmatpush.xpose.msra.mxu0 0.0
    %1249 = vmatpush.xpose.msra.mxu0 0.0
    %1250 = vmatpush.xpose.msra.mxu0 0.0
    %1251 = vmatpush.xpose.msra.mxu0 0.0
    %1252 = vmatpush.xpose.msra.mxu0 0.0
    %1253 = vmatpush.xpose.msra.mxu0 0.0
    %1254 = vmatpush.xpose.msra.mxu0 0.0
    %1255 = vmatpush.xpose.msra.mxu0 0.0
    %1256 = vmatpush.xpose.msra.mxu0 %v477
    %1257 = vmatpush.xpose.msra.mxu0 %v379
    %1258 = vmatpush.xpose.msra.mxu0 %v281
    %1259 = vmatpush.xpose.msra.mxu0 %v183
    %1260 = vmatmul.f32.gmra.mxu0 %v611
    %v1261 = vpop.f32.mrf.mxu0
    %v1262 = vadd.f32 %v1242, %v1261
    %1263 = vdwg.mxu0
    %1264 = vmatpush.xpose.msra.mxu0 0.0
    %1265 = vmatpush.xpose.msra.mxu0 0.0
    %1266 = vmatpush.xpose.msra.mxu0 0.0
    %1267 = vmatpush.xpose.msra.mxu0 0.0
    %1268 = vmatpush.xpose.msra.mxu0 0.0
    %1269 = vmatpush.xpose.msra.mxu0 0.0
    %1270 = vmatpush.xpose.msra.mxu0 0.0
    %1271 = vmatpush.xpose.msra.mxu0 0.0
    %1272 = vmatpush.xpose.msra.mxu0 0.0
    %1273 = vmatpush.xpose.msra.mxu0 0.0
    %1274 = vmatpush.xpose.msra.mxu0 0.0
    %1275 = vmatpush.xpose.msra.mxu0 0.0
    %1276 = vmatpush.xpose.msra.mxu0 %v478
    %1277 = vmatpush.xpose.msra.mxu0 %v380
    %1278 = vmatpush.xpose.msra.mxu0 %v282
    %1279 = vmatpush.xpose.msra.mxu0 %v184
    %1280 = vmatmul.f32.gmra.mxu0 %v612
    %v1281 = vpop.f32.mrf.mxu0
    %v1282 = vadd.f32 %v1262, %v1281
    %1283 = vdwg.mxu0
    %1284 = vmatpush.xpose.msra.mxu0 0.0
    %1285 = vmatpush.xpose.msra.mxu0 0.0
    %1286 = vmatpush.xpose.msra.mxu0 0.0
    %1287 = vmatpush.xpose.msra.mxu0 0.0
    %1288 = vmatpush.xpose.msra.mxu0 0.0
    %1289 = vmatpush.xpose.msra.mxu0 0.0
    %1290 = vmatpush.xpose.msra.mxu0 0.0
    %1291 = vmatpush.xpose.msra.mxu0 0.0
    %1292 = vmatpush.xpose.msra.mxu0 0.0
    %1293 = vmatpush.xpose.msra.mxu0 0.0
    %1294 = vmatpush.xpose.msra.mxu0 0.0
    %1295 = vmatpush.xpose.msra.mxu0 0.0
    %1296 = vmatpush.xpose.msra.mxu0 %v479
    %1297 = vmatpush.xpose.msra.mxu0 %v381
    %1298 = vmatpush.xpose.msra.mxu0 %v283
    %1299 = vmatpush.xpose.msra.mxu0 %v185
    %1300 = vmatmul.f32.gmra.mxu0 %v615
    %v1301 = vpop.f32.mrf.mxu0
    %v1302 = vadd.f32 %v1282, %v1301
    %1303 = vdwg.mxu0
    %1304 = vmatpush.xpose.msra.mxu0 0.0
    %1305 = vmatpush.xpose.msra.mxu0 0.0
    %1306 = vmatpush.xpose.msra.mxu0 0.0
    %1307 = vmatpush.xpose.msra.mxu0 0.0
    %1308 = vmatpush.xpose.msra.mxu0 0.0
    %1309 = vmatpush.xpose.msra.mxu0 0.0
    %1310 = vmatpush.xpose.msra.mxu0 0.0
    %1311 = vmatpush.xpose.msra.mxu0 0.0
    %1312 = vmatpush.xpose.msra.mxu0 0.0
    %1313 = vmatpush.xpose.msra.mxu0 0.0
    %1314 = vmatpush.xpose.msra.mxu0 0.0
    %1315 = vmatpush.xpose.msra.mxu0 0.0
    %1316 = vmatpush.xpose.msra.mxu0 %v480
    %1317 = vmatpush.xpose.msra.mxu0 %v382
    %1318 = vmatpush.xpose.msra.mxu0 %v284
    %1319 = vmatpush.xpose.msra.mxu0 %v186
    %1320 = vmatmul.f32.gmra.mxu0 %v616
    %v1321 = vpop.f32.mrf.mxu0
    %v1322 = vadd.f32 %v1302, %v1321
    %1323 = vdwg.mxu0
    %1324 = vmatpush.xpose.msra.mxu0 0.0
    %1325 = vmatpush.xpose.msra.mxu0 0.0
    %1326 = vmatpush.xpose.msra.mxu0 0.0
    %1327 = vmatpush.xpose.msra.mxu0 0.0
    %1328 = vmatpush.xpose.msra.mxu0 0.0
    %1329 = vmatpush.xpose.msra.mxu0 0.0
    %1330 = vmatpush.xpose.msra.mxu0 0.0
    %1331 = vmatpush.xpose.msra.mxu0 0.0
    %1332 = vmatpush.xpose.msra.mxu0 0.0
    %1333 = vmatpush.xpose.msra.mxu0 0.0
    %1334 = vmatpush.xpose.msra.mxu0 0.0
    %1335 = vmatpush.xpose.msra.mxu0 0.0
    %1336 = vmatpush.xpose.msra.mxu0 %v481
    %1337 = vmatpush.xpose.msra.mxu0 %v383
    %1338 = vmatpush.xpose.msra.mxu0 %v285
    %1339 = vmatpush.xpose.msra.mxu0 %v187
    %1340 = vmatmul.f32.gmra.mxu0 %v617
    %v1341 = vpop.f32.mrf.mxu0
    %v1342 = vadd.f32 %v1322, %v1341
    %1343 = vdwg.mxu0
    %1344 = vmatpush.xpose.msra.mxu0 0.0
    %1345 = vmatpush.xpose.msra.mxu0 0.0
    %1346 = vmatpush.xpose.msra.mxu0 0.0
    %1347 = vmatpush.xpose.msra.mxu0 0.0
    %1348 = vmatpush.xpose.msra.mxu0 0.0
    %1349 = vmatpush.xpose.msra.mxu0 0.0
    %1350 = vmatpush.xpose.msra.mxu0 0.0
    %1351 = vmatpush.xpose.msra.mxu0 0.0
    %1352 = vmatpush.xpose.msra.mxu0 0.0
    %1353 = vmatpush.xpose.msra.mxu0 0.0
    %1354 = vmatpush.xpose.msra.mxu0 0.0
    %1355 = vmatpush.xpose.msra.mxu0 0.0
    %1356 = vmatpush.xpose.msra.mxu0 %v482
    %1357 = vmatpush.xpose.msra.mxu0 %v384
    %1358 = vmatpush.xpose.msra.mxu0 %v286
    %1359 = vmatpush.xpose.msra.mxu0 %v188
    %1360 = vmatmul.f32.gmra.mxu0 %v618
    %v1361 = vpop.f32.mrf.mxu0
    %v1362 = vadd.f32 %v1342, %v1361
    %1363 = vdwg.mxu0
    %1364 = vmatpush.xpose.msra.mxu0 0.0
    %1365 = vmatpush.xpose.msra.mxu0 0.0
    %1366 = vmatpush.xpose.msra.mxu0 0.0
    %1367 = vmatpush.xpose.msra.mxu0 0.0
    %1368 = vmatpush.xpose.msra.mxu0 0.0
    %1369 = vmatpush.xpose.msra.mxu0 0.0
    %1370 = vmatpush.xpose.msra.mxu0 0.0
    %1371 = vmatpush.xpose.msra.mxu0 0.0
    %1372 = vmatpush.xpose.msra.mxu0 0.0
    %1373 = vmatpush.xpose.msra.mxu0 0.0
    %1374 = vmatpush.xpose.msra.mxu0 0.0
    %1375 = vmatpush.xpose.msra.mxu0 0.0
    %1376 = vmatpush.xpose.msra.mxu0 %v483
    %1377 = vmatpush.xpose.msra.mxu0 %v385
    %1378 = vmatpush.xpose.msra.mxu0 %v287
    %1379 = vmatpush.xpose.msra.mxu0 %v189
    %1380 = vmatmul.f32.gmra.mxu0 %v619
    %v1381 = vpop.f32.mrf.mxu0
    %v1382 = vadd.f32 %v1362, %v1381
    %1383 = vdwg.mxu0
    %1384 = vmatpush.xpose.msra.mxu0 0.0
    %1385 = vmatpush.xpose.msra.mxu0 0.0
    %1386 = vmatpush.xpose.msra.mxu0 0.0
    %1387 = vmatpush.xpose.msra.mxu0 0.0
    %1388 = vmatpush.xpose.msra.mxu0 0.0
    %1389 = vmatpush.xpose.msra.mxu0 0.0
    %1390 = vmatpush.xpose.msra.mxu0 0.0
    %1391 = vmatpush.xpose.msra.mxu0 0.0
    %1392 = vmatpush.xpose.msra.mxu0 0.0
    %1393 = vmatpush.xpose.msra.mxu0 0.0
    %1394 = vmatpush.xpose.msra.mxu0 0.0
    %1395 = vmatpush.xpose.msra.mxu0 0.0
    %1396 = vmatpush.xpose.msra.mxu0 %v484
    %1397 = vmatpush.xpose.msra.mxu0 %v386
    %1398 = vmatpush.xpose.msra.mxu0 %v288
    %1399 = vmatpush.xpose.msra.mxu0 %v190
    %1400 = vmatmul.f32.gmra.mxu0 %v620
    %v1401 = vpop.f32.mrf.mxu0
    %v1402 = vadd.f32 %v1382, %v1401
    %1403 = vdwg.mxu0
    %1404 = vmatpush.xpose.msra.mxu0 0.0
    %1405 = vmatpush.xpose.msra.mxu0 0.0
    %1406 = vmatpush.xpose.msra.mxu0 0.0
    %1407 = vmatpush.xpose.msra.mxu0 0.0
    %1408 = vmatpush.xpose.msra.mxu0 0.0
    %1409 = vmatpush.xpose.msra.mxu0 0.0
    %1410 = vmatpush.xpose.msra.mxu0 0.0
    %1411 = vmatpush.xpose.msra.mxu0 0.0
    %1412 = vmatpush.xpose.msra.mxu0 0.0
    %1413 = vmatpush.xpose.msra.mxu0 0.0
    %1414 = vmatpush.xpose.msra.mxu0 0.0
    %1415 = vmatpush.xpose.msra.mxu0 0.0
    %1416 = vmatpush.xpose.msra.mxu0 %v485
    %1417 = vmatpush.xpose.msra.mxu0 %v387
    %1418 = vmatpush.xpose.msra.mxu0 %v289
    %1419 = vmatpush.xpose.msra.mxu0 %v191
    %1420 = vmatmul.f32.gmra.mxu0 %v621
    %v1421 = vpop.f32.mrf.mxu0
    %v1422 = vadd.f32 %v1402, %v1421
    %1423 = vdwg.mxu0
    %1424 = vmatpush.xpose.msra.mxu0 0.0
    %1425 = vmatpush.xpose.msra.mxu0 0.0
    %1426 = vmatpush.xpose.msra.mxu0 0.0
    %1427 = vmatpush.xpose.msra.mxu0 0.0
    %1428 = vmatpush.xpose.msra.mxu0 0.0
    %1429 = vmatpush.xpose.msra.mxu0 0.0
    %1430 = vmatpush.xpose.msra.mxu0 0.0
    %1431 = vmatpush.xpose.msra.mxu0 0.0
    %1432 = vmatpush.xpose.msra.mxu0 0.0
    %1433 = vmatpush.xpose.msra.mxu0 0.0
    %1434 = vmatpush.xpose.msra.mxu0 0.0
    %1435 = vmatpush.xpose.msra.mxu0 0.0
    %1436 = vmatpush.xpose.msra.mxu0 %v486
    %1437 = vmatpush.xpose.msra.mxu0 %v388
    %1438 = vmatpush.xpose.msra.mxu0 %v290
    %1439 = vmatpush.xpose.msra.mxu0 %v192
    %1440 = vmatmul.f32.gmra.mxu0 %v622
    %v1441 = vpop.f32.mrf.mxu0
    %v1442 = vadd.f32 %v1422, %v1441
    %1443 = vdwg.mxu0
    %1444 = vmatpush.xpose.msra.mxu0 0.0
    %1445 = vmatpush.xpose.msra.mxu0 0.0
    %1446 = vmatpush.xpose.msra.mxu0 0.0
    %1447 = vmatpush.xpose.msra.mxu0 0.0
    %1448 = vmatpush.xpose.msra.mxu0 0.0
    %1449 = vmatpush.xpose.msra.mxu0 0.0
    %1450 = vmatpush.xpose.msra.mxu0 0.0
    %1451 = vmatpush.xpose.msra.mxu0 0.0
    %1452 = vmatpush.xpose.msra.mxu0 0.0
    %1453 = vmatpush.xpose.msra.mxu0 0.0
    %1454 = vmatpush.xpose.msra.mxu0 0.0
    %1455 = vmatpush.xpose.msra.mxu0 0.0
    %1456 = vmatpush.xpose.msra.mxu0 %v487
    %1457 = vmatpush.xpose.msra.mxu0 %v389
    %1458 = vmatpush.xpose.msra.mxu0 %v291
    %1459 = vmatpush.xpose.msra.mxu0 %v193
    %1460 = vmatmul.f32.gmra.mxu0 %v625
    %v1461 = vpop.f32.mrf.mxu0
    %v1462 = vadd.f32 %v1442, %v1461
    %1463 = vdwg.mxu0
    %1464 = vmatpush.xpose.msra.mxu0 0.0
    %1465 = vmatpush.xpose.msra.mxu0 0.0
    %1466 = vmatpush.xpose.msra.mxu0 0.0
    %1467 = vmatpush.xpose.msra.mxu0 0.0
    %1468 = vmatpush.xpose.msra.mxu0 0.0
    %1469 = vmatpush.xpose.msra.mxu0 0.0
    %1470 = vmatpush.xpose.msra.mxu0 0.0
    %1471 = vmatpush.xpose.msra.mxu0 0.0
    %1472 = vmatpush.xpose.msra.mxu0 0.0
    %1473 = vmatpush.xpose.msra.mxu0 0.0
    %1474 = vmatpush.xpose.msra.mxu0 0.0
    %1475 = vmatpush.xpose.msra.mxu0 0.0
    %1476 = vmatpush.xpose.msra.mxu0 %v488
    %1477 = vmatpush.xpose.msra.mxu0 %v390
    %1478 = vmatpush.xpose.msra.mxu0 %v292
    %1479 = vmatpush.xpose.msra.mxu0 %v194
    %1480 = vmatmul.f32.gmra.mxu0 %v626
    %v1481 = vpop.f32.mrf.mxu0
    %v1482 = vadd.f32 %v1462, %v1481
    %1483 = vdwg.mxu0
    %1484 = vmatpush.xpose.msra.mxu0 0.0
    %1485 = vmatpush.xpose.msra.mxu0 0.0
    %1486 = vmatpush.xpose.msra.mxu0 0.0
    %1487 = vmatpush.xpose.msra.mxu0 0.0
    %1488 = vmatpush.xpose.msra.mxu0 0.0
    %1489 = vmatpush.xpose.msra.mxu0 0.0
    %1490 = vmatpush.xpose.msra.mxu0 0.0
    %1491 = vmatpush.xpose.msra.mxu0 0.0
    %1492 = vmatpush.xpose.msra.mxu0 0.0
    %1493 = vmatpush.xpose.msra.mxu0 0.0
    %1494 = vmatpush.xpose.msra.mxu0 0.0
    %1495 = vmatpush.xpose.msra.mxu0 0.0
    %1496 = vmatpush.xpose.msra.mxu0 %v489
    %1497 = vmatpush.xpose.msra.mxu0 %v391
    %1498 = vmatpush.xpose.msra.mxu0 %v293
    %1499 = vmatpush.xpose.msra.mxu0 %v195
    %1500 = vmatmul.f32.gmra.mxu0 %v627
    %v1501 = vpop.f32.mrf.mxu0
    %v1502 = vadd.f32 %v1482, %v1501
    %1503 = vdwg.mxu0
    %1504 = vmatpush.xpose.msra.mxu0 0.0
    %1505 = vmatpush.xpose.msra.mxu0 0.0
    %1506 = vmatpush.xpose.msra.mxu0 0.0
    %1507 = vmatpush.xpose.msra.mxu0 0.0
    %1508 = vmatpush.xpose.msra.mxu0 0.0
    %1509 = vmatpush.xpose.msra.mxu0 0.0
    %1510 = vmatpush.xpose.msra.mxu0 0.0
    %1511 = vmatpush.xpose.msra.mxu0 0.0
    %1512 = vmatpush.xpose.msra.mxu0 0.0
    %1513 = vmatpush.xpose.msra.mxu0 0.0
    %1514 = vmatpush.xpose.msra.mxu0 0.0
    %1515 = vmatpush.xpose.msra.mxu0 0.0
    %1516 = vmatpush.xpose.msra.mxu0 %v490
    %1517 = vmatpush.xpose.msra.mxu0 %v392
    %1518 = vmatpush.xpose.msra.mxu0 %v294
    %1519 = vmatpush.xpose.msra.mxu0 %v196
    %1520 = vmatmul.f32.gmra.mxu0 %v628
    %v1521 = vpop.f32.mrf.mxu0
    %v1522 = vadd.f32 %v1502, %v1521
    %1523 = vdwg.mxu0
    %1524 = vmatpush.xpose.msra.mxu0 0.0
    %1525 = vmatpush.xpose.msra.mxu0 0.0
    %1526 = vmatpush.xpose.msra.mxu0 0.0
    %1527 = vmatpush.xpose.msra.mxu0 0.0
    %1528 = vmatpush.xpose.msra.mxu0 0.0
    %1529 = vmatpush.xpose.msra.mxu0 0.0
    %1530 = vmatpush.xpose.msra.mxu0 0.0
    %1531 = vmatpush.xpose.msra.mxu0 0.0
    %1532 = vmatpush.xpose.msra.mxu0 0.0
    %1533 = vmatpush.xpose.msra.mxu0 0.0
    %1534 = vmatpush.xpose.msra.mxu0 0.0
    %1535 = vmatpush.xpose.msra.mxu0 0.0
    %1536 = vmatpush.xpose.msra.mxu0 %v491
    %1537 = vmatpush.xpose.msra.mxu0 %v393
    %1538 = vmatpush.xpose.msra.mxu0 %v295
    %1539 = vmatpush.xpose.msra.mxu0 %v197
    %1540 = vmatmul.f32.gmra.mxu0 %v629
    %v1541 = vpop.f32.mrf.mxu0
    %v1542 = vadd.f32 %v1522, %v1541
    %1543 = vdwg.mxu0
    %1544 = vmatpush.xpose.msra.mxu0 0.0
    %1545 = vmatpush.xpose.msra.mxu0 0.0
    %1546 = vmatpush.xpose.msra.mxu0 0.0
    %1547 = vmatpush.xpose.msra.mxu0 0.0
    %1548 = vmatpush.xpose.msra.mxu0 0.0
    %1549 = vmatpush.xpose.msra.mxu0 0.0
    %1550 = vmatpush.xpose.msra.mxu0 0.0
    %1551 = vmatpush.xpose.msra.mxu0 0.0
    %1552 = vmatpush.xpose.msra.mxu0 0.0
    %1553 = vmatpush.xpose.msra.mxu0 0.0
    %1554 = vmatpush.xpose.msra.mxu0 0.0
    %1555 = vmatpush.xpose.msra.mxu0 0.0
    %1556 = vmatpush.xpose.msra.mxu0 %v492
    %1557 = vmatpush.xpose.msra.mxu0 %v394
    %1558 = vmatpush.xpose.msra.mxu0 %v296
    %1559 = vmatpush.xpose.msra.mxu0 %v198
    %1560 = vmatmul.f32.gmra.mxu0 %v630
    %v1561 = vpop.f32.mrf.mxu0
    %v1562 = vadd.f32 %v1542, %v1561
    %1563 = vdwg.mxu0
    %1564 = vmatpush.xpose.msra.mxu0 0.0
    %1565 = vmatpush.xpose.msra.mxu0 0.0
    %1566 = vmatpush.xpose.msra.mxu0 0.0
    %1567 = vmatpush.xpose.msra.mxu0 0.0
    %1568 = vmatpush.xpose.msra.mxu0 0.0
    %1569 = vmatpush.xpose.msra.mxu0 0.0
    %1570 = vmatpush.xpose.msra.mxu0 0.0
    %1571 = vmatpush.xpose.msra.mxu0 0.0
    %1572 = vmatpush.xpose.msra.mxu0 0.0
    %1573 = vmatpush.xpose.msra.mxu0 0.0
    %1574 = vmatpush.xpose.msra.mxu0 0.0
    %1575 = vmatpush.xpose.msra.mxu0 0.0
    %1576 = vmatpush.xpose.msra.mxu0 %v493
    %1577 = vmatpush.xpose.msra.mxu0 %v395
    %1578 = vmatpush.xpose.msra.mxu0 %v297
    %1579 = vmatpush.xpose.msra.mxu0 %v199
    %1580 = vmatmul.f32.gmra.mxu0 %v631
    %v1581 = vpop.f32.mrf.mxu0
    %v1582 = vadd.f32 %v1562, %v1581
    %1583 = vdwg.mxu0
    %1584 = vmatpush.xpose.msra.mxu0 0.0
    %1585 = vmatpush.xpose.msra.mxu0 0.0
    %1586 = vmatpush.xpose.msra.mxu0 0.0
    %1587 = vmatpush.xpose.msra.mxu0 0.0
    %1588 = vmatpush.xpose.msra.mxu0 0.0
    %1589 = vmatpush.xpose.msra.mxu0 0.0
    %1590 = vmatpush.xpose.msra.mxu0 0.0
    %1591 = vmatpush.xpose.msra.mxu0 0.0
    %1592 = vmatpush.xpose.msra.mxu0 0.0
    %1593 = vmatpush.xpose.msra.mxu0 0.0
    %1594 = vmatpush.xpose.msra.mxu0 0.0
    %1595 = vmatpush.xpose.msra.mxu0 0.0
    %1596 = vmatpush.xpose.msra.mxu0 %v494
    %1597 = vmatpush.xpose.msra.mxu0 %v396
    %1598 = vmatpush.xpose.msra.mxu0 %v298
    %1599 = vmatpush.xpose.msra.mxu0 %v200
    %1600 = vmatmul.f32.gmra.mxu0 %v632
    %v1601 = vpop.f32.mrf.mxu0
    %v1602 = vadd.f32 %v1582, %v1601
    %1603 = vdwg.mxu0
    %1604 = vmatpush.xpose.msra.mxu0 0.0
    %1605 = vmatpush.xpose.msra.mxu0 0.0
    %1606 = vmatpush.xpose.msra.mxu0 0.0
    %1607 = vmatpush.xpose.msra.mxu0 0.0
    %1608 = vmatpush.xpose.msra.mxu0 0.0
    %1609 = vmatpush.xpose.msra.mxu0 0.0
    %1610 = vmatpush.xpose.msra.mxu0 0.0
    %1611 = vmatpush.xpose.msra.mxu0 0.0
    %1612 = vmatpush.xpose.msra.mxu0 0.0
    %1613 = vmatpush.xpose.msra.mxu0 0.0
    %1614 = vmatpush.xpose.msra.mxu0 0.0
    %1615 = vmatpush.xpose.msra.mxu0 0.0
    %1616 = vmatpush.xpose.msra.mxu0 %v495
    %1617 = vmatpush.xpose.msra.mxu0 %v397
    %1618 = vmatpush.xpose.msra.mxu0 %v299
    %1619 = vmatpush.xpose.msra.mxu0 %v201
    %1620 = vmatmul.f32.gmra.mxu0 %v635
    %v1621 = vpop.f32.mrf.mxu0
    %v1622 = vadd.f32 %v1602, %v1621
    %1623 = vdwg.mxu0
    %1624 = vmatpush.xpose.msra.mxu0 0.0
    %1625 = vmatpush.xpose.msra.mxu0 0.0
    %1626 = vmatpush.xpose.msra.mxu0 0.0
    %1627 = vmatpush.xpose.msra.mxu0 0.0
    %1628 = vmatpush.xpose.msra.mxu0 0.0
    %1629 = vmatpush.xpose.msra.mxu0 0.0
    %1630 = vmatpush.xpose.msra.mxu0 0.0
    %1631 = vmatpush.xpose.msra.mxu0 0.0
    %1632 = vmatpush.xpose.msra.mxu0 0.0
    %1633 = vmatpush.xpose.msra.mxu0 0.0
    %1634 = vmatpush.xpose.msra.mxu0 0.0
    %1635 = vmatpush.xpose.msra.mxu0 0.0
    %1636 = vmatpush.xpose.msra.mxu0 %v496
    %1637 = vmatpush.xpose.msra.mxu0 %v398
    %1638 = vmatpush.xpose.msra.mxu0 %v300
    %1639 = vmatpush.xpose.msra.mxu0 %v202
    %1640 = vmatmul.f32.gmra.mxu0 %v636
    %v1641 = vpop.f32.mrf.mxu0
    %v1642 = vadd.f32 %v1622, %v1641
    %1643 = vdwg.mxu0
    %1644 = vmatpush.xpose.msra.mxu0 0.0
    %1645 = vmatpush.xpose.msra.mxu0 0.0
    %1646 = vmatpush.xpose.msra.mxu0 0.0
    %1647 = vmatpush.xpose.msra.mxu0 0.0
    %1648 = vmatpush.xpose.msra.mxu0 0.0
    %1649 = vmatpush.xpose.msra.mxu0 0.0
    %1650 = vmatpush.xpose.msra.mxu0 0.0
    %1651 = vmatpush.xpose.msra.mxu0 0.0
    %1652 = vmatpush.xpose.msra.mxu0 0.0
    %1653 = vmatpush.xpose.msra.mxu0 0.0
    %1654 = vmatpush.xpose.msra.mxu0 0.0
    %1655 = vmatpush.xpose.msra.mxu0 0.0
    %1656 = vmatpush.xpose.msra.mxu0 %v497
    %1657 = vmatpush.xpose.msra.mxu0 %v399
    %1658 = vmatpush.xpose.msra.mxu0 %v301
    %1659 = vmatpush.xpose.msra.mxu0 %v203
    %1660 = vmatmul.f32.gmra.mxu0 %v637
    %v1661 = vpop.f32.mrf.mxu0
    %v1662 = vadd.f32 %v1642, %v1661
    %1663 = vdwg.mxu0
    %1664 = vmatpush.xpose.msra.mxu0 0.0
    %1665 = vmatpush.xpose.msra.mxu0 0.0
    %1666 = vmatpush.xpose.msra.mxu0 0.0
    %1667 = vmatpush.xpose.msra.mxu0 0.0
    %1668 = vmatpush.xpose.msra.mxu0 0.0
    %1669 = vmatpush.xpose.msra.mxu0 0.0
    %1670 = vmatpush.xpose.msra.mxu0 0.0
    %1671 = vmatpush.xpose.msra.mxu0 0.0
    %1672 = vmatpush.xpose.msra.mxu0 0.0
    %1673 = vmatpush.xpose.msra.mxu0 0.0
    %1674 = vmatpush.xpose.msra.mxu0 0.0
    %1675 = vmatpush.xpose.msra.mxu0 0.0
    %1676 = vmatpush.xpose.msra.mxu0 %v498
    %1677 = vmatpush.xpose.msra.mxu0 %v400
    %1678 = vmatpush.xpose.msra.mxu0 %v302
    %1679 = vmatpush.xpose.msra.mxu0 %v204
    %1680 = vmatmul.f32.gmra.mxu0 %v638
    %v1681 = vpop.f32.mrf.mxu0
    %v1682 = vadd.f32 %v1662, %v1681
    %1683 = vdwg.mxu0
    %1684 = vmatpush.xpose.msra.mxu0 0.0
    %1685 = vmatpush.xpose.msra.mxu0 0.0
    %1686 = vmatpush.xpose.msra.mxu0 0.0
    %1687 = vmatpush.xpose.msra.mxu0 0.0
    %1688 = vmatpush.xpose.msra.mxu0 0.0
    %1689 = vmatpush.xpose.msra.mxu0 0.0
    %1690 = vmatpush.xpose.msra.mxu0 0.0
    %1691 = vmatpush.xpose.msra.mxu0 0.0
    %1692 = vmatpush.xpose.msra.mxu0 0.0
    %1693 = vmatpush.xpose.msra.mxu0 0.0
    %1694 = vmatpush.xpose.msra.mxu0 0.0
    %1695 = vmatpush.xpose.msra.mxu0 0.0
    %1696 = vmatpush.xpose.msra.mxu0 %v499
    %1697 = vmatpush.xpose.msra.mxu0 %v401
    %1698 = vmatpush.xpose.msra.mxu0 %v303
    %1699 = vmatpush.xpose.msra.mxu0 %v205
    %1700 = vmatmul.f32.gmra.mxu0 %v639
    %v1701 = vpop.f32.mrf.mxu0
    %v1702 = vadd.f32 %v1682, %v1701
    %1703 = vdwg.mxu0
    %1704 = vmatpush.xpose.msra.mxu0 0.0
    %1705 = vmatpush.xpose.msra.mxu0 0.0
    %1706 = vmatpush.xpose.msra.mxu0 0.0
    %1707 = vmatpush.xpose.msra.mxu0 0.0
    %1708 = vmatpush.xpose.msra.mxu0 0.0
    %1709 = vmatpush.xpose.msra.mxu0 0.0
    %1710 = vmatpush.xpose.msra.mxu0 0.0
    %1711 = vmatpush.xpose.msra.mxu0 0.0
    %1712 = vmatpush.xpose.msra.mxu0 0.0
    %1713 = vmatpush.xpose.msra.mxu0 0.0
    %1714 = vmatpush.xpose.msra.mxu0 0.0
    %1715 = vmatpush.xpose.msra.mxu0 0.0
    %1716 = vmatpush.xpose.msra.mxu0 %v500
    %1717 = vmatpush.xpose.msra.mxu0 %v402
    %1718 = vmatpush.xpose.msra.mxu0 %v304
    %1719 = vmatpush.xpose.msra.mxu0 %v206
    %1720 = vmatmul.f32.gmra.mxu0 %v640
    %v1721 = vpop.f32.mrf.mxu0
    %v1722 = vadd.f32 %v1702, %v1721
    %1723 = vdwg.mxu0
    %1724 = vmatpush.xpose.msra.mxu0 0.0
    %1725 = vmatpush.xpose.msra.mxu0 0.0
    %1726 = vmatpush.xpose.msra.mxu0 0.0
    %1727 = vmatpush.xpose.msra.mxu0 0.0
    %1728 = vmatpush.xpose.msra.mxu0 0.0
    %1729 = vmatpush.xpose.msra.mxu0 0.0
    %1730 = vmatpush.xpose.msra.mxu0 0.0
    %1731 = vmatpush.xpose.msra.mxu0 0.0
    %1732 = vmatpush.xpose.msra.mxu0 0.0
    %1733 = vmatpush.xpose.msra.mxu0 0.0
    %1734 = vmatpush.xpose.msra.mxu0 0.0
    %1735 = vmatpush.xpose.msra.mxu0 0.0
    %1736 = vmatpush.xpose.msra.mxu0 %v501
    %1737 = vmatpush.xpose.msra.mxu0 %v403
    %1738 = vmatpush.xpose.msra.mxu0 %v305
    %1739 = vmatpush.xpose.msra.mxu0 %v207
    %1740 = vmatmul.f32.gmra.mxu0 %v641
    %v1741 = vpop.f32.mrf.mxu0
    %v1742 = vadd.f32 %v1722, %v1741
    %1743 = vdwg.mxu0
    %1744 = vmatpush.xpose.msra.mxu0 0.0
    %1745 = vmatpush.xpose.msra.mxu0 0.0
    %1746 = vmatpush.xpose.msra.mxu0 0.0
    %1747 = vmatpush.xpose.msra.mxu0 0.0
    %1748 = vmatpush.xpose.msra.mxu0 0.0
    %1749 = vmatpush.xpose.msra.mxu0 0.0
    %1750 = vmatpush.xpose.msra.mxu0 0.0
    %1751 = vmatpush.xpose.msra.mxu0 0.0
    %1752 = vmatpush.xpose.msra.mxu0 0.0
    %1753 = vmatpush.xpose.msra.mxu0 0.0
    %1754 = vmatpush.xpose.msra.mxu0 0.0
    %1755 = vmatpush.xpose.msra.mxu0 0.0
    %1756 = vmatpush.xpose.msra.mxu0 %v502
    %1757 = vmatpush.xpose.msra.mxu0 %v404
    %1758 = vmatpush.xpose.msra.mxu0 %v306
    %1759 = vmatpush.xpose.msra.mxu0 %v208
    %1760 = vmatmul.f32.gmra.mxu0 %v642
    %v1761 = vpop.f32.mrf.mxu0
    %v1762 = vadd.f32 %v1742, %v1761
    %1763 = vdwg.mxu0
    %1764 = vmatpush.xpose.msra.mxu0 0.0
    %1765 = vmatpush.xpose.msra.mxu0 0.0
    %1766 = vmatpush.xpose.msra.mxu0 0.0
    %1767 = vmatpush.xpose.msra.mxu0 0.0
    %1768 = vmatpush.xpose.msra.mxu0 0.0
    %1769 = vmatpush.xpose.msra.mxu0 0.0
    %1770 = vmatpush.xpose.msra.mxu0 0.0
    %1771 = vmatpush.xpose.msra.mxu0 0.0
    %1772 = vmatpush.xpose.msra.mxu0 0.0
    %1773 = vmatpush.xpose.msra.mxu0 0.0
    %1774 = vmatpush.xpose.msra.mxu0 0.0
    %1775 = vmatpush.xpose.msra.mxu0 0.0
    %1776 = vmatpush.xpose.msra.mxu0 %v503
    %1777 = vmatpush.xpose.msra.mxu0 %v405
    %1778 = vmatpush.xpose.msra.mxu0 %v307
    %1779 = vmatpush.xpose.msra.mxu0 %v209
    %1780 = vmatmul.f32.gmra.mxu0 %v645
    %v1781 = vpop.f32.mrf.mxu0
    %v1782 = vadd.f32 %v1762, %v1781
    %1783 = vdwg.mxu0
    %1784 = vmatpush.xpose.msra.mxu0 0.0
    %1785 = vmatpush.xpose.msra.mxu0 0.0
    %1786 = vmatpush.xpose.msra.mxu0 0.0
    %1787 = vmatpush.xpose.msra.mxu0 0.0
    %1788 = vmatpush.xpose.msra.mxu0 0.0
    %1789 = vmatpush.xpose.msra.mxu0 0.0
    %1790 = vmatpush.xpose.msra.mxu0 0.0
    %1791 = vmatpush.xpose.msra.mxu0 0.0
    %1792 = vmatpush.xpose.msra.mxu0 0.0
    %1793 = vmatpush.xpose.msra.mxu0 0.0
    %1794 = vmatpush.xpose.msra.mxu0 0.0
    %1795 = vmatpush.xpose.msra.mxu0 0.0
    %1796 = vmatpush.xpose.msra.mxu0 %v504
    %1797 = vmatpush.xpose.msra.mxu0 %v406
    %1798 = vmatpush.xpose.msra.mxu0 %v308
    %1799 = vmatpush.xpose.msra.mxu0 %v210
    %1800 = vmatmul.f32.gmra.mxu0 %v646
    %v1801 = vpop.f32.mrf.mxu0
    %v1802 = vadd.f32 %v1782, %v1801
    %1803 = vdwg.mxu0
    %1804 = vmatpush.xpose.msra.mxu0 0.0
    %1805 = vmatpush.xpose.msra.mxu0 0.0
    %1806 = vmatpush.xpose.msra.mxu0 0.0
    %1807 = vmatpush.xpose.msra.mxu0 0.0
    %1808 = vmatpush.xpose.msra.mxu0 0.0
    %1809 = vmatpush.xpose.msra.mxu0 0.0
    %1810 = vmatpush.xpose.msra.mxu0 0.0
    %1811 = vmatpush.xpose.msra.mxu0 0.0
    %1812 = vmatpush.xpose.msra.mxu0 0.0
    %1813 = vmatpush.xpose.msra.mxu0 0.0
    %1814 = vmatpush.xpose.msra.mxu0 0.0
    %1815 = vmatpush.xpose.msra.mxu0 0.0
    %1816 = vmatpush.xpose.msra.mxu0 %v505
    %1817 = vmatpush.xpose.msra.mxu0 %v407
    %1818 = vmatpush.xpose.msra.mxu0 %v309
    %1819 = vmatpush.xpose.msra.mxu0 %v211
    %1820 = vmatmul.f32.gmra.mxu0 %v647
    %v1821 = vpop.f32.mrf.mxu0
    %v1822 = vadd.f32 %v1802, %v1821
    %1823 = vdwg.mxu0
    %1824 = vmatpush.xpose.msra.mxu0 0.0
    %1825 = vmatpush.xpose.msra.mxu0 0.0
    %1826 = vmatpush.xpose.msra.mxu0 0.0
    %1827 = vmatpush.xpose.msra.mxu0 0.0
    %1828 = vmatpush.xpose.msra.mxu0 0.0
    %1829 = vmatpush.xpose.msra.mxu0 0.0
    %1830 = vmatpush.xpose.msra.mxu0 0.0
    %1831 = vmatpush.xpose.msra.mxu0 0.0
    %1832 = vmatpush.xpose.msra.mxu0 0.0
    %1833 = vmatpush.xpose.msra.mxu0 0.0
    %1834 = vmatpush.xpose.msra.mxu0 0.0
    %1835 = vmatpush.xpose.msra.mxu0 0.0
    %1836 = vmatpush.xpose.msra.mxu0 %v506
    %1837 = vmatpush.xpose.msra.mxu0 %v408
    %1838 = vmatpush.xpose.msra.mxu0 %v310
    %1839 = vmatpush.xpose.msra.mxu0 %v212
    %1840 = vmatmul.f32.gmra.mxu0 %v648
    %v1841 = vpop.f32.mrf.mxu0
    %v1842 = vadd.f32 %v1822, %v1841
    %1843 = vdwg.mxu0
    %1844 = vmatpush.xpose.msra.mxu0 0.0
    %1845 = vmatpush.xpose.msra.mxu0 0.0
    %1846 = vmatpush.xpose.msra.mxu0 0.0
    %1847 = vmatpush.xpose.msra.mxu0 0.0
    %1848 = vmatpush.xpose.msra.mxu0 0.0
    %1849 = vmatpush.xpose.msra.mxu0 0.0
    %1850 = vmatpush.xpose.msra.mxu0 0.0
    %1851 = vmatpush.xpose.msra.mxu0 0.0
    %1852 = vmatpush.xpose.msra.mxu0 0.0
    %1853 = vmatpush.xpose.msra.mxu0 0.0
    %1854 = vmatpush.xpose.msra.mxu0 0.0
    %1855 = vmatpush.xpose.msra.mxu0 0.0
    %1856 = vmatpush.xpose.msra.mxu0 %v507
    %1857 = vmatpush.xpose.msra.mxu0 %v409
    %1858 = vmatpush.xpose.msra.mxu0 %v311
    %1859 = vmatpush.xpose.msra.mxu0 %v213
    %1860 = vmatmul.f32.gmra.mxu0 %v649
    %v1861 = vpop.f32.mrf.mxu0
    %v1862 = vadd.f32 %v1842, %v1861
    %1863 = vdwg.mxu0
    %1864 = vmatpush.xpose.msra.mxu0 0.0
    %1865 = vmatpush.xpose.msra.mxu0 0.0
    %1866 = vmatpush.xpose.msra.mxu0 0.0
    %1867 = vmatpush.xpose.msra.mxu0 0.0
    %1868 = vmatpush.xpose.msra.mxu0 0.0
    %1869 = vmatpush.xpose.msra.mxu0 0.0
    %1870 = vmatpush.xpose.msra.mxu0 0.0
    %1871 = vmatpush.xpose.msra.mxu0 0.0
    %1872 = vmatpush.xpose.msra.mxu0 0.0
    %1873 = vmatpush.xpose.msra.mxu0 0.0
    %1874 = vmatpush.xpose.msra.mxu0 0.0
    %1875 = vmatpush.xpose.msra.mxu0 0.0
    %1876 = vmatpush.xpose.msra.mxu0 %v508
    %1877 = vmatpush.xpose.msra.mxu0 %v410
    %1878 = vmatpush.xpose.msra.mxu0 %v312
    %1879 = vmatpush.xpose.msra.mxu0 %v214
    %1880 = vmatmul.f32.gmra.mxu0 %v650
    %v1881 = vpop.f32.mrf.mxu0
    %v1882 = vadd.f32 %v1862, %v1881
    %1883 = vdwg.mxu0
    %1884 = vmatpush.xpose.msra.mxu0 0.0
    %1885 = vmatpush.xpose.msra.mxu0 0.0
    %1886 = vmatpush.xpose.msra.mxu0 0.0
    %1887 = vmatpush.xpose.msra.mxu0 0.0
    %1888 = vmatpush.xpose.msra.mxu0 0.0
    %1889 = vmatpush.xpose.msra.mxu0 0.0
    %1890 = vmatpush.xpose.msra.mxu0 0.0
    %1891 = vmatpush.xpose.msra.mxu0 0.0
    %1892 = vmatpush.xpose.msra.mxu0 0.0
    %1893 = vmatpush.xpose.msra.mxu0 0.0
    %1894 = vmatpush.xpose.msra.mxu0 0.0
    %1895 = vmatpush.xpose.msra.mxu0 0.0
    %1896 = vmatpush.xpose.msra.mxu0 %v509
    %1897 = vmatpush.xpose.msra.mxu0 %v411
    %1898 = vmatpush.xpose.msra.mxu0 %v313
    %1899 = vmatpush.xpose.msra.mxu0 %v215
    %1900 = vmatmul.f32.gmra.mxu0 %v651
    %v1901 = vpop.f32.mrf.mxu0
    %v1902 = vadd.f32 %v1882, %v1901
    %1903 = vdwg.mxu0
    %1904 = vmatpush.xpose.msra.mxu0 0.0
    %1905 = vmatpush.xpose.msra.mxu0 0.0
    %1906 = vmatpush.xpose.msra.mxu0 0.0
    %1907 = vmatpush.xpose.msra.mxu0 0.0
    %1908 = vmatpush.xpose.msra.mxu0 0.0
    %1909 = vmatpush.xpose.msra.mxu0 0.0
    %1910 = vmatpush.xpose.msra.mxu0 0.0
    %1911 = vmatpush.xpose.msra.mxu0 0.0
    %1912 = vmatpush.xpose.msra.mxu0 0.0
    %1913 = vmatpush.xpose.msra.mxu0 0.0
    %1914 = vmatpush.xpose.msra.mxu0 0.0
    %1915 = vmatpush.xpose.msra.mxu0 0.0
    %1916 = vmatpush.xpose.msra.mxu0 %v510
    %1917 = vmatpush.xpose.msra.mxu0 %v412
    %1918 = vmatpush.xpose.msra.mxu0 %v314
    %1919 = vmatpush.xpose.msra.mxu0 %v216
    %1920 = vmatmul.f32.gmra.mxu0 %v652
    %v1921 = vpop.f32.mrf.mxu0
    %v1922 = vadd.f32 %v1902, %v1921
    %1923 = vdwg.mxu0
    %1924 = vmatpush.xpose.msra.mxu0 0.0
    %1925 = vmatpush.xpose.msra.mxu0 0.0
    %1926 = vmatpush.xpose.msra.mxu0 0.0
    %1927 = vmatpush.xpose.msra.mxu0 0.0
    %1928 = vmatpush.xpose.msra.mxu0 0.0
    %1929 = vmatpush.xpose.msra.mxu0 0.0
    %1930 = vmatpush.xpose.msra.mxu0 0.0
    %1931 = vmatpush.xpose.msra.mxu0 0.0
    %1932 = vmatpush.xpose.msra.mxu0 0.0
    %1933 = vmatpush.xpose.msra.mxu0 0.0
    %1934 = vmatpush.xpose.msra.mxu0 0.0
    %1935 = vmatpush.xpose.msra.mxu0 0.0
    %1936 = vmatpush.xpose.msra.mxu0 %v511
    %1937 = vmatpush.xpose.msra.mxu0 %v413
    %1938 = vmatpush.xpose.msra.mxu0 %v315
    %1939 = vmatpush.xpose.msra.mxu0 %v217
    %1940 = vmatmul.f32.gmra.mxu0 %v655
    %v1941 = vpop.f32.mrf.mxu0
    %v1942 = vadd.f32 %v1922, %v1941
    %1943 = vdwg.mxu0
    %1944 = vmatpush.xpose.msra.mxu0 0.0
    %1945 = vmatpush.xpose.msra.mxu0 0.0
    %1946 = vmatpush.xpose.msra.mxu0 0.0
    %1947 = vmatpush.xpose.msra.mxu0 0.0
    %1948 = vmatpush.xpose.msra.mxu0 0.0
    %1949 = vmatpush.xpose.msra.mxu0 0.0
    %1950 = vmatpush.xpose.msra.mxu0 0.0
    %1951 = vmatpush.xpose.msra.mxu0 0.0
    %1952 = vmatpush.xpose.msra.mxu0 0.0
    %1953 = vmatpush.xpose.msra.mxu0 0.0
    %1954 = vmatpush.xpose.msra.mxu0 0.0
    %1955 = vmatpush.xpose.msra.mxu0 0.0
    %1956 = vmatpush.xpose.msra.mxu0 %v512
    %1957 = vmatpush.xpose.msra.mxu0 %v414
    %1958 = vmatpush.xpose.msra.mxu0 %v316
    %1959 = vmatpush.xpose.msra.mxu0 %v218
    %1960 = vmatmul.f32.gmra.mxu0 %v656
    %v1961 = vpop.f32.mrf.mxu0
    %v1962 = vadd.f32 %v1942, %v1961
    %1963 = vdwg.mxu0
    %1964 = vmatpush.xpose.msra.mxu0 0.0
    %1965 = vmatpush.xpose.msra.mxu0 0.0
    %1966 = vmatpush.xpose.msra.mxu0 0.0
    %1967 = vmatpush.xpose.msra.mxu0 0.0
    %1968 = vmatpush.xpose.msra.mxu0 0.0
    %1969 = vmatpush.xpose.msra.mxu0 0.0
    %1970 = vmatpush.xpose.msra.mxu0 0.0
    %1971 = vmatpush.xpose.msra.mxu0 0.0
    %1972 = vmatpush.xpose.msra.mxu0 0.0
    %1973 = vmatpush.xpose.msra.mxu0 0.0
    %1974 = vmatpush.xpose.msra.mxu0 0.0
    %1975 = vmatpush.xpose.msra.mxu0 0.0
    %1976 = vmatpush.xpose.msra.mxu0 %v513
    %1977 = vmatpush.xpose.msra.mxu0 %v415
    %1978 = vmatpush.xpose.msra.mxu0 %v317
    %1979 = vmatpush.xpose.msra.mxu0 %v219
    %1980 = vmatmul.f32.gmra.mxu0 %v657
    %v1981 = vpop.f32.mrf.mxu0
    %v1982 = vadd.f32 %v1962, %v1981
    %1983 = vdwg.mxu0
    %1984 = vmatpush.xpose.msra.mxu0 0.0
    %1985 = vmatpush.xpose.msra.mxu0 0.0
    %1986 = vmatpush.xpose.msra.mxu0 0.0
    %1987 = vmatpush.xpose.msra.mxu0 0.0
    %1988 = vmatpush.xpose.msra.mxu0 0.0
    %1989 = vmatpush.xpose.msra.mxu0 0.0
    %1990 = vmatpush.xpose.msra.mxu0 0.0
    %1991 = vmatpush.xpose.msra.mxu0 0.0
    %1992 = vmatpush.xpose.msra.mxu0 0.0
    %1993 = vmatpush.xpose.msra.mxu0 0.0
    %1994 = vmatpush.xpose.msra.mxu0 0.0
    %1995 = vmatpush.xpose.msra.mxu0 0.0
    %1996 = vmatpush.xpose.msra.mxu0 %v514
    %1997 = vmatpush.xpose.msra.mxu0 %v416
    %1998 = vmatpush.xpose.msra.mxu0 %v318
    %1999 = vmatpush.xpose.msra.mxu0 %v220
    %2000 = vmatmul.f32.gmra.mxu0 %v658
    %v2001 = vpop.f32.mrf.mxu0
    %v2002 = vadd.f32 %v1982, %v2001
    %2003 = vdwg.mxu0
    %2004 = vmatpush.xpose.msra.mxu0 0.0
    %2005 = vmatpush.xpose.msra.mxu0 0.0
    %2006 = vmatpush.xpose.msra.mxu0 0.0
    %2007 = vmatpush.xpose.msra.mxu0 0.0
    %2008 = vmatpush.xpose.msra.mxu0 0.0
    %2009 = vmatpush.xpose.msra.mxu0 0.0
    %2010 = vmatpush.xpose.msra.mxu0 0.0
    %2011 = vmatpush.xpose.msra.mxu0 0.0
    %2012 = vmatpush.xpose.msra.mxu0 0.0
    %2013 = vmatpush.xpose.msra.mxu0 0.0
    %2014 = vmatpush.xpose.msra.mxu0 0.0
    %2015 = vmatpush.xpose.msra.mxu0 0.0
    %2016 = vmatpush.xpose.msra.mxu0 %v515
    %2017 = vmatpush.xpose.msra.mxu0 %v417
    %2018 = vmatpush.xpose.msra.mxu0 %v319
    %2019 = vmatpush.xpose.msra.mxu0 %v221
    %2020 = vmatmul.f32.gmra.mxu0 %v659
    %v2021 = vpop.f32.mrf.mxu0
    %v2022 = vadd.f32 %v2002, %v2021
    %2023 = vdwg.mxu0
    %2024 = vmatpush.xpose.msra.mxu0 0.0
    %2025 = vmatpush.xpose.msra.mxu0 0.0
    %2026 = vmatpush.xpose.msra.mxu0 0.0
    %2027 = vmatpush.xpose.msra.mxu0 0.0
    %2028 = vmatpush.xpose.msra.mxu0 0.0
    %2029 = vmatpush.xpose.msra.mxu0 0.0
    %2030 = vmatpush.xpose.msra.mxu0 0.0
    %2031 = vmatpush.xpose.msra.mxu0 0.0
    %2032 = vmatpush.xpose.msra.mxu0 0.0
    %2033 = vmatpush.xpose.msra.mxu0 0.0
    %2034 = vmatpush.xpose.msra.mxu0 0.0
    %2035 = vmatpush.xpose.msra.mxu0 0.0
    %2036 = vmatpush.xpose.msra.mxu0 %v516
    %2037 = vmatpush.xpose.msra.mxu0 %v418
    %2038 = vmatpush.xpose.msra.mxu0 %v320
    %2039 = vmatpush.xpose.msra.mxu0 %v222
    %2040 = vmatmul.f32.gmra.mxu0 %v660
    %v2041 = vpop.f32.mrf.mxu0
    %v2042 = vadd.f32 %v2022, %v2041
    %2043 = vdwg.mxu0
    %2044 = vmatpush.xpose.msra.mxu0 0.0
    %2045 = vmatpush.xpose.msra.mxu0 0.0
    %2046 = vmatpush.xpose.msra.mxu0 0.0
    %2047 = vmatpush.xpose.msra.mxu0 0.0
    %2048 = vmatpush.xpose.msra.mxu0 0.0
    %2049 = vmatpush.xpose.msra.mxu0 0.0
    %2050 = vmatpush.xpose.msra.mxu0 0.0
    %2051 = vmatpush.xpose.msra.mxu0 0.0
    %2052 = vmatpush.xpose.msra.mxu0 0.0
    %2053 = vmatpush.xpose.msra.mxu0 0.0
    %2054 = vmatpush.xpose.msra.mxu0 0.0
    %2055 = vmatpush.xpose.msra.mxu0 0.0
    %2056 = vmatpush.xpose.msra.mxu0 %v517
    %2057 = vmatpush.xpose.msra.mxu0 %v419
    %2058 = vmatpush.xpose.msra.mxu0 %v321
    %2059 = vmatpush.xpose.msra.mxu0 %v223
    %2060 = vmatmul.f32.gmra.mxu0 %v661
    %v2061 = vpop.f32.mrf.mxu0
    %v2062 = vadd.f32 %v2042, %v2061
    %2063 = vdwg.mxu0
    %2064 = vmatpush.xpose.msra.mxu0 0.0
    %2065 = vmatpush.xpose.msra.mxu0 0.0
    %2066 = vmatpush.xpose.msra.mxu0 0.0
    %2067 = vmatpush.xpose.msra.mxu0 0.0
    %2068 = vmatpush.xpose.msra.mxu0 0.0
    %2069 = vmatpush.xpose.msra.mxu0 0.0
    %2070 = vmatpush.xpose.msra.mxu0 0.0
    %2071 = vmatpush.xpose.msra.mxu0 0.0
    %2072 = vmatpush.xpose.msra.mxu0 0.0
    %2073 = vmatpush.xpose.msra.mxu0 0.0
    %2074 = vmatpush.xpose.msra.mxu0 0.0
    %2075 = vmatpush.xpose.msra.mxu0 0.0
    %2076 = vmatpush.xpose.msra.mxu0 %v518
    %2077 = vmatpush.xpose.msra.mxu0 %v420
    %2078 = vmatpush.xpose.msra.mxu0 %v322
    %2079 = vmatpush.xpose.msra.mxu0 %v224
    %2080 = vmatmul.f32.gmra.mxu0 %v662
    %v2081 = vpop.f32.mrf.mxu0
    %v2082 = vadd.f32 %v2062, %v2081
    %2083 = vdwg.mxu0
    %2084 = vmatpush.xpose.msra.mxu0 0.0
    %2085 = vmatpush.xpose.msra.mxu0 0.0
    %2086 = vmatpush.xpose.msra.mxu0 0.0
    %2087 = vmatpush.xpose.msra.mxu0 0.0
    %2088 = vmatpush.xpose.msra.mxu0 0.0
    %2089 = vmatpush.xpose.msra.mxu0 0.0
    %2090 = vmatpush.xpose.msra.mxu0 0.0
    %2091 = vmatpush.xpose.msra.mxu0 0.0
    %2092 = vmatpush.xpose.msra.mxu0 0.0
    %2093 = vmatpush.xpose.msra.mxu0 0.0
    %2094 = vmatpush.xpose.msra.mxu0 0.0
    %2095 = vmatpush.xpose.msra.mxu0 0.0
    %2096 = vmatpush.xpose.msra.mxu0 %v519
    %2097 = vmatpush.xpose.msra.mxu0 %v421
    %2098 = vmatpush.xpose.msra.mxu0 %v323
    %2099 = vmatpush.xpose.msra.mxu0 %v225
    %2100 = vmatmul.f32.gmra.mxu0 %v665
    %v2101 = vpop.f32.mrf.mxu0
    %v2102 = vadd.f32 %v2082, %v2101
    %2103 = vdwg.mxu0
    %2104 = vmatpush.xpose.msra.mxu0 0.0
    %2105 = vmatpush.xpose.msra.mxu0 0.0
    %2106 = vmatpush.xpose.msra.mxu0 0.0
    %2107 = vmatpush.xpose.msra.mxu0 0.0
    %2108 = vmatpush.xpose.msra.mxu0 0.0
    %2109 = vmatpush.xpose.msra.mxu0 0.0
    %2110 = vmatpush.xpose.msra.mxu0 0.0
    %2111 = vmatpush.xpose.msra.mxu0 0.0
    %2112 = vmatpush.xpose.msra.mxu0 0.0
    %2113 = vmatpush.xpose.msra.mxu0 0.0
    %2114 = vmatpush.xpose.msra.mxu0 0.0
    %2115 = vmatpush.xpose.msra.mxu0 0.0
    %2116 = vmatpush.xpose.msra.mxu0 %v520
    %2117 = vmatpush.xpose.msra.mxu0 %v422
    %2118 = vmatpush.xpose.msra.mxu0 %v324
    %2119 = vmatpush.xpose.msra.mxu0 %v226
    %2120 = vmatmul.f32.gmra.mxu0 %v666
    %v2121 = vpop.f32.mrf.mxu0
    %v2122 = vadd.f32 %v2102, %v2121
    %2123 = vdwg.mxu0
    %2124 = vmatpush.xpose.msra.mxu0 0.0
    %2125 = vmatpush.xpose.msra.mxu0 0.0
    %2126 = vmatpush.xpose.msra.mxu0 0.0
    %2127 = vmatpush.xpose.msra.mxu0 0.0
    %2128 = vmatpush.xpose.msra.mxu0 0.0
    %2129 = vmatpush.xpose.msra.mxu0 0.0
    %2130 = vmatpush.xpose.msra.mxu0 0.0
    %2131 = vmatpush.xpose.msra.mxu0 0.0
    %2132 = vmatpush.xpose.msra.mxu0 0.0
    %2133 = vmatpush.xpose.msra.mxu0 0.0
    %2134 = vmatpush.xpose.msra.mxu0 0.0
    %2135 = vmatpush.xpose.msra.mxu0 0.0
    %2136 = vmatpush.xpose.msra.mxu0 %v521
    %2137 = vmatpush.xpose.msra.mxu0 %v423
    %2138 = vmatpush.xpose.msra.mxu0 %v325
    %2139 = vmatpush.xpose.msra.mxu0 %v227
    %2140 = vmatmul.f32.gmra.mxu0 %v667
    %v2141 = vpop.f32.mrf.mxu0
    %v2142 = vadd.f32 %v2122, %v2141
    %2143 = vdwg.mxu0
    %2144 = vmatpush.xpose.msra.mxu0 0.0
    %2145 = vmatpush.xpose.msra.mxu0 0.0
    %2146 = vmatpush.xpose.msra.mxu0 0.0
    %2147 = vmatpush.xpose.msra.mxu0 0.0
    %2148 = vmatpush.xpose.msra.mxu0 0.0
    %2149 = vmatpush.xpose.msra.mxu0 0.0
    %2150 = vmatpush.xpose.msra.mxu0 0.0
    %2151 = vmatpush.xpose.msra.mxu0 0.0
    %2152 = vmatpush.xpose.msra.mxu0 0.0
    %2153 = vmatpush.xpose.msra.mxu0 0.0
    %2154 = vmatpush.xpose.msra.mxu0 0.0
    %2155 = vmatpush.xpose.msra.mxu0 0.0
    %2156 = vmatpush.xpose.msra.mxu0 %v522
    %2157 = vmatpush.xpose.msra.mxu0 %v424
    %2158 = vmatpush.xpose.msra.mxu0 %v326
    %2159 = vmatpush.xpose.msra.mxu0 %v228
    %2160 = vmatmul.f32.gmra.mxu0 %v668
    %v2161 = vpop.f32.mrf.mxu0
    %v2162 = vadd.f32 %v2142, %v2161
    %2163 = vdwg.mxu0
    %2164 = vmatpush.xpose.msra.mxu0 0.0
    %2165 = vmatpush.xpose.msra.mxu0 0.0
    %2166 = vmatpush.xpose.msra.mxu0 0.0
    %2167 = vmatpush.xpose.msra.mxu0 0.0
    %2168 = vmatpush.xpose.msra.mxu0 0.0
    %2169 = vmatpush.xpose.msra.mxu0 0.0
    %2170 = vmatpush.xpose.msra.mxu0 0.0
    %2171 = vmatpush.xpose.msra.mxu0 0.0
    %2172 = vmatpush.xpose.msra.mxu0 0.0
    %2173 = vmatpush.xpose.msra.mxu0 0.0
    %2174 = vmatpush.xpose.msra.mxu0 0.0
    %2175 = vmatpush.xpose.msra.mxu0 0.0
    %2176 = vmatpush.xpose.msra.mxu0 %v523
    %2177 = vmatpush.xpose.msra.mxu0 %v425
    %2178 = vmatpush.xpose.msra.mxu0 %v327
    %2179 = vmatpush.xpose.msra.mxu0 %v229
    %2180 = vmatmul.f32.gmra.mxu0 %v669
    %v2181 = vpop.f32.mrf.mxu0
    %v2182 = vadd.f32 %v2162, %v2181
    %2183 = vdwg.mxu0
    %2184 = vmatpush.xpose.msra.mxu0 0.0
    %2185 = vmatpush.xpose.msra.mxu0 0.0
    %2186 = vmatpush.xpose.msra.mxu0 0.0
    %2187 = vmatpush.xpose.msra.mxu0 0.0
    %2188 = vmatpush.xpose.msra.mxu0 0.0
    %2189 = vmatpush.xpose.msra.mxu0 0.0
    %2190 = vmatpush.xpose.msra.mxu0 0.0
    %2191 = vmatpush.xpose.msra.mxu0 0.0
    %2192 = vmatpush.xpose.msra.mxu0 0.0
    %2193 = vmatpush.xpose.msra.mxu0 0.0
    %2194 = vmatpush.xpose.msra.mxu0 0.0
    %2195 = vmatpush.xpose.msra.mxu0 0.0
    %2196 = vmatpush.xpose.msra.mxu0 %v524
    %2197 = vmatpush.xpose.msra.mxu0 %v426
    %2198 = vmatpush.xpose.msra.mxu0 %v328
    %2199 = vmatpush.xpose.msra.mxu0 %v230
    %2200 = vmatmul.f32.gmra.mxu0 %v670
    %v2201 = vpop.f32.mrf.mxu0
    %v2202 = vadd.f32 %v2182, %v2201
    %2203 = vdwg.mxu0
    %2204 = vmatpush.xpose.msra.mxu0 0.0
    %2205 = vmatpush.xpose.msra.mxu0 0.0
    %2206 = vmatpush.xpose.msra.mxu0 0.0
    %2207 = vmatpush.xpose.msra.mxu0 0.0
    %2208 = vmatpush.xpose.msra.mxu0 0.0
    %2209 = vmatpush.xpose.msra.mxu0 0.0
    %2210 = vmatpush.xpose.msra.mxu0 0.0
    %2211 = vmatpush.xpose.msra.mxu0 0.0
    %2212 = vmatpush.xpose.msra.mxu0 0.0
    %2213 = vmatpush.xpose.msra.mxu0 0.0
    %2214 = vmatpush.xpose.msra.mxu0 0.0
    %2215 = vmatpush.xpose.msra.mxu0 0.0
    %2216 = vmatpush.xpose.msra.mxu0 %v525
    %2217 = vmatpush.xpose.msra.mxu0 %v427
    %2218 = vmatpush.xpose.msra.mxu0 %v329
    %2219 = vmatpush.xpose.msra.mxu0 %v231
    %2220 = vmatmul.f32.gmra.mxu0 %v671
    %v2221 = vpop.f32.mrf.mxu0
    %v2222 = vadd.f32 %v2202, %v2221
    %2223 = vdwg.mxu0
    %2224 = vmatpush.xpose.msra.mxu0 0.0
    %2225 = vmatpush.xpose.msra.mxu0 0.0
    %2226 = vmatpush.xpose.msra.mxu0 0.0
    %2227 = vmatpush.xpose.msra.mxu0 0.0
    %2228 = vmatpush.xpose.msra.mxu0 0.0
    %2229 = vmatpush.xpose.msra.mxu0 0.0
    %2230 = vmatpush.xpose.msra.mxu0 0.0
    %2231 = vmatpush.xpose.msra.mxu0 0.0
    %2232 = vmatpush.xpose.msra.mxu0 0.0
    %2233 = vmatpush.xpose.msra.mxu0 0.0
    %2234 = vmatpush.xpose.msra.mxu0 0.0
    %2235 = vmatpush.xpose.msra.mxu0 0.0
    %2236 = vmatpush.xpose.msra.mxu0 %v526
    %2237 = vmatpush.xpose.msra.mxu0 %v428
    %2238 = vmatpush.xpose.msra.mxu0 %v330
    %2239 = vmatpush.xpose.msra.mxu0 %v232
    %2240 = vmatmul.f32.gmra.mxu0 %v672
    %v2241 = vpop.f32.mrf.mxu0
    %v2242 = vadd.f32 %v2222, %v2241
    %2243 = vdwg.mxu0
    %2244 = vmatpush.xpose.msra.mxu0 0.0
    %2245 = vmatpush.xpose.msra.mxu0 0.0
    %2246 = vmatpush.xpose.msra.mxu0 0.0
    %2247 = vmatpush.xpose.msra.mxu0 0.0
    %2248 = vmatpush.xpose.msra.mxu0 0.0
    %2249 = vmatpush.xpose.msra.mxu0 0.0
    %2250 = vmatpush.xpose.msra.mxu0 0.0
    %2251 = vmatpush.xpose.msra.mxu0 0.0
    %2252 = vmatpush.xpose.msra.mxu0 0.0
    %2253 = vmatpush.xpose.msra.mxu0 0.0
    %2254 = vmatpush.xpose.msra.mxu0 0.0
    %2255 = vmatpush.xpose.msra.mxu0 0.0
    %2256 = vmatpush.xpose.msra.mxu0 %v527
    %2257 = vmatpush.xpose.msra.mxu0 %v429
    %2258 = vmatpush.xpose.msra.mxu0 %v331
    %2259 = vmatpush.xpose.msra.mxu0 %v233
    %2260 = vmatmul.f32.gmra.mxu0 %v675
    %v2261 = vpop.f32.mrf.mxu0
    %v2262 = vadd.f32 %v2242, %v2261
    %2263 = vdwg.mxu0
    %2264 = vmatpush.xpose.msra.mxu0 0.0
    %2265 = vmatpush.xpose.msra.mxu0 0.0
    %2266 = vmatpush.xpose.msra.mxu0 0.0
    %2267 = vmatpush.xpose.msra.mxu0 0.0
    %2268 = vmatpush.xpose.msra.mxu0 0.0
    %2269 = vmatpush.xpose.msra.mxu0 0.0
    %2270 = vmatpush.xpose.msra.mxu0 0.0
    %2271 = vmatpush.xpose.msra.mxu0 0.0
    %2272 = vmatpush.xpose.msra.mxu0 0.0
    %2273 = vmatpush.xpose.msra.mxu0 0.0
    %2274 = vmatpush.xpose.msra.mxu0 0.0
    %2275 = vmatpush.xpose.msra.mxu0 0.0
    %2276 = vmatpush.xpose.msra.mxu0 %v528
    %2277 = vmatpush.xpose.msra.mxu0 %v430
    %2278 = vmatpush.xpose.msra.mxu0 %v332
    %2279 = vmatpush.xpose.msra.mxu0 %v234
    %2280 = vmatmul.f32.gmra.mxu0 %v676
    %v2281 = vpop.f32.mrf.mxu0
    %v2282 = vadd.f32 %v2262, %v2281
    %2283 = vdwg.mxu0
    %2284 = vmatpush.xpose.msra.mxu0 0.0
    %2285 = vmatpush.xpose.msra.mxu0 0.0
    %2286 = vmatpush.xpose.msra.mxu0 0.0
    %2287 = vmatpush.xpose.msra.mxu0 0.0
    %2288 = vmatpush.xpose.msra.mxu0 0.0
    %2289 = vmatpush.xpose.msra.mxu0 0.0
    %2290 = vmatpush.xpose.msra.mxu0 0.0
    %2291 = vmatpush.xpose.msra.mxu0 0.0
    %2292 = vmatpush.xpose.msra.mxu0 0.0
    %2293 = vmatpush.xpose.msra.mxu0 0.0
    %2294 = vmatpush.xpose.msra.mxu0 0.0
    %2295 = vmatpush.xpose.msra.mxu0 0.0
    %2296 = vmatpush.xpose.msra.mxu0 %v529
    %2297 = vmatpush.xpose.msra.mxu0 %v431
    %2298 = vmatpush.xpose.msra.mxu0 %v333
    %2299 = vmatpush.xpose.msra.mxu0 %v235
    %2300 = vmatmul.f32.gmra.mxu0 %v677
    %v2301 = vpop.f32.mrf.mxu0
    %v2302 = vadd.f32 %v2282, %v2301
    %2303 = vdwg.mxu0
    %2304 = vmatpush.xpose.msra.mxu0 0.0
    %2305 = vmatpush.xpose.msra.mxu0 0.0
    %2306 = vmatpush.xpose.msra.mxu0 0.0
    %2307 = vmatpush.xpose.msra.mxu0 0.0
    %2308 = vmatpush.xpose.msra.mxu0 0.0
    %2309 = vmatpush.xpose.msra.mxu0 0.0
    %2310 = vmatpush.xpose.msra.mxu0 0.0
    %2311 = vmatpush.xpose.msra.mxu0 0.0
    %2312 = vmatpush.xpose.msra.mxu0 0.0
    %2313 = vmatpush.xpose.msra.mxu0 0.0
    %2314 = vmatpush.xpose.msra.mxu0 0.0
    %2315 = vmatpush.xpose.msra.mxu0 0.0
    %2316 = vmatpush.xpose.msra.mxu0 %v530
    %2317 = vmatpush.xpose.msra.mxu0 %v432
    %2318 = vmatpush.xpose.msra.mxu0 %v334
    %2319 = vmatpush.xpose.msra.mxu0 %v236
    %2320 = vmatmul.f32.gmra.mxu0 %v678
    %v2321 = vpop.f32.mrf.mxu0
    %v2322 = vadd.f32 %v2302, %v2321
    %2323 = vdwg.mxu0
    %2324 = vmatpush.xpose.msra.mxu0 0.0
    %2325 = vmatpush.xpose.msra.mxu0 0.0
    %2326 = vmatpush.xpose.msra.mxu0 0.0
    %2327 = vmatpush.xpose.msra.mxu0 0.0
    %2328 = vmatpush.xpose.msra.mxu0 0.0
    %2329 = vmatpush.xpose.msra.mxu0 0.0
    %2330 = vmatpush.xpose.msra.mxu0 0.0
    %2331 = vmatpush.xpose.msra.mxu0 0.0
    %2332 = vmatpush.xpose.msra.mxu0 0.0
    %2333 = vmatpush.xpose.msra.mxu0 0.0
    %2334 = vmatpush.xpose.msra.mxu0 0.0
    %2335 = vmatpush.xpose.msra.mxu0 0.0
    %2336 = vmatpush.xpose.msra.mxu0 %v531
    %2337 = vmatpush.xpose.msra.mxu0 %v433
    %2338 = vmatpush.xpose.msra.mxu0 %v335
    %2339 = vmatpush.xpose.msra.mxu0 %v237
    %2340 = vmatmul.f32.gmra.mxu0 %v679
    %v2341 = vpop.f32.mrf.mxu0
    %v2342 = vadd.f32 %v2322, %v2341
    %2343 = vdwg.mxu0
    %2344 = vmatpush.xpose.msra.mxu0 0.0
    %2345 = vmatpush.xpose.msra.mxu0 0.0
    %2346 = vmatpush.xpose.msra.mxu0 0.0
    %2347 = vmatpush.xpose.msra.mxu0 0.0
    %2348 = vmatpush.xpose.msra.mxu0 0.0
    %2349 = vmatpush.xpose.msra.mxu0 0.0
    %2350 = vmatpush.xpose.msra.mxu0 0.0
    %2351 = vmatpush.xpose.msra.mxu0 0.0
    %2352 = vmatpush.xpose.msra.mxu0 0.0
    %2353 = vmatpush.xpose.msra.mxu0 0.0
    %2354 = vmatpush.xpose.msra.mxu0 0.0
    %2355 = vmatpush.xpose.msra.mxu0 0.0
    %2356 = vmatpush.xpose.msra.mxu0 %v532
    %2357 = vmatpush.xpose.msra.mxu0 %v434
    %2358 = vmatpush.xpose.msra.mxu0 %v336
    %2359 = vmatpush.xpose.msra.mxu0 %v238
    %2360 = vmatmul.f32.gmra.mxu0 %v680
    %v2361 = vpop.f32.mrf.mxu0
    %v2362 = vadd.f32 %v2342, %v2361
    %2363 = vdwg.mxu0
    %2364 = vmatpush.xpose.msra.mxu0 0.0
    %2365 = vmatpush.xpose.msra.mxu0 0.0
    %2366 = vmatpush.xpose.msra.mxu0 0.0
    %2367 = vmatpush.xpose.msra.mxu0 0.0
    %2368 = vmatpush.xpose.msra.mxu0 0.0
    %2369 = vmatpush.xpose.msra.mxu0 0.0
    %2370 = vmatpush.xpose.msra.mxu0 0.0
    %2371 = vmatpush.xpose.msra.mxu0 0.0
    %2372 = vmatpush.xpose.msra.mxu0 0.0
    %2373 = vmatpush.xpose.msra.mxu0 0.0
    %2374 = vmatpush.xpose.msra.mxu0 0.0
    %2375 = vmatpush.xpose.msra.mxu0 0.0
    %2376 = vmatpush.xpose.msra.mxu0 %v533
    %2377 = vmatpush.xpose.msra.mxu0 %v435
    %2378 = vmatpush.xpose.msra.mxu0 %v337
    %2379 = vmatpush.xpose.msra.mxu0 %v239
    %2380 = vmatmul.f32.gmra.mxu0 %v681
    %v2381 = vpop.f32.mrf.mxu0
    %v2382 = vadd.f32 %v2362, %v2381
    %2383 = vdwg.mxu0
    %2384 = vmatpush.xpose.msra.mxu0 0.0
    %2385 = vmatpush.xpose.msra.mxu0 0.0
    %2386 = vmatpush.xpose.msra.mxu0 0.0
    %2387 = vmatpush.xpose.msra.mxu0 0.0
    %2388 = vmatpush.xpose.msra.mxu0 0.0
    %2389 = vmatpush.xpose.msra.mxu0 0.0
    %2390 = vmatpush.xpose.msra.mxu0 0.0
    %2391 = vmatpush.xpose.msra.mxu0 0.0
    %2392 = vmatpush.xpose.msra.mxu0 0.0
    %2393 = vmatpush.xpose.msra.mxu0 0.0
    %2394 = vmatpush.xpose.msra.mxu0 0.0
    %2395 = vmatpush.xpose.msra.mxu0 0.0
    %2396 = vmatpush.xpose.msra.mxu0 %v534
    %2397 = vmatpush.xpose.msra.mxu0 %v436
    %2398 = vmatpush.xpose.msra.mxu0 %v338
    %2399 = vmatpush.xpose.msra.mxu0 %v240
    %2400 = vmatmul.f32.gmra.mxu0 %v682
    %v2401 = vpop.f32.mrf.mxu0
    %v2402 = vadd.f32 %v2382, %v2401
    %2403 = vdwg.mxu0
    %2404 = vmatpush.xpose.msra.mxu0 0.0
    %2405 = vmatpush.xpose.msra.mxu0 0.0
    %2406 = vmatpush.xpose.msra.mxu0 0.0
    %2407 = vmatpush.xpose.msra.mxu0 0.0
    %2408 = vmatpush.xpose.msra.mxu0 0.0
    %2409 = vmatpush.xpose.msra.mxu0 0.0
    %2410 = vmatpush.xpose.msra.mxu0 0.0
    %2411 = vmatpush.xpose.msra.mxu0 0.0
    %2412 = vmatpush.xpose.msra.mxu0 0.0
    %2413 = vmatpush.xpose.msra.mxu0 0.0
    %2414 = vmatpush.xpose.msra.mxu0 0.0
    %2415 = vmatpush.xpose.msra.mxu0 0.0
    %2416 = vmatpush.xpose.msra.mxu0 %v535
    %2417 = vmatpush.xpose.msra.mxu0 %v437
    %2418 = vmatpush.xpose.msra.mxu0 %v339
    %2419 = vmatpush.xpose.msra.mxu0 %v241
    %2420 = vmatmul.f32.gmra.mxu0 %v685
    %v2421 = vpop.f32.mrf.mxu0
    %v2422 = vadd.f32 %v2402, %v2421
    %2423 = vdwg.mxu0
    %2424 = vmatpush.xpose.msra.mxu0 0.0
    %2425 = vmatpush.xpose.msra.mxu0 0.0
    %2426 = vmatpush.xpose.msra.mxu0 0.0
    %2427 = vmatpush.xpose.msra.mxu0 0.0
    %2428 = vmatpush.xpose.msra.mxu0 0.0
    %2429 = vmatpush.xpose.msra.mxu0 0.0
    %2430 = vmatpush.xpose.msra.mxu0 0.0
    %2431 = vmatpush.xpose.msra.mxu0 0.0
    %2432 = vmatpush.xpose.msra.mxu0 0.0
    %2433 = vmatpush.xpose.msra.mxu0 0.0
    %2434 = vmatpush.xpose.msra.mxu0 0.0
    %2435 = vmatpush.xpose.msra.mxu0 0.0
    %2436 = vmatpush.xpose.msra.mxu0 %v536
    %2437 = vmatpush.xpose.msra.mxu0 %v438
    %2438 = vmatpush.xpose.msra.mxu0 %v340
    %2439 = vmatpush.xpose.msra.mxu0 %v242
    %2440 = vmatmul.f32.gmra.mxu0 %v686
    %v2441 = vpop.f32.mrf.mxu0
    %v2442 = vadd.f32 %v2422, %v2441
    %2443 = vdwg.mxu0
    %2444 = vmatpush.xpose.msra.mxu0 0.0
    %2445 = vmatpush.xpose.msra.mxu0 0.0
    %2446 = vmatpush.xpose.msra.mxu0 0.0
    %2447 = vmatpush.xpose.msra.mxu0 0.0
    %2448 = vmatpush.xpose.msra.mxu0 0.0
    %2449 = vmatpush.xpose.msra.mxu0 0.0
    %2450 = vmatpush.xpose.msra.mxu0 0.0
    %2451 = vmatpush.xpose.msra.mxu0 0.0
    %2452 = vmatpush.xpose.msra.mxu0 0.0
    %2453 = vmatpush.xpose.msra.mxu0 0.0
    %2454 = vmatpush.xpose.msra.mxu0 0.0
    %2455 = vmatpush.xpose.msra.mxu0 0.0
    %2456 = vmatpush.xpose.msra.mxu0 %v537
    %2457 = vmatpush.xpose.msra.mxu0 %v439
    %2458 = vmatpush.xpose.msra.mxu0 %v341
    %2459 = vmatpush.xpose.msra.mxu0 %v243
    %2460 = vmatmul.f32.gmra.mxu0 %v687
    %v2461 = vpop.f32.mrf.mxu0
    %v2462 = vadd.f32 %v2442, %v2461
    %2463 = vdwg.mxu0
    %2464 = vmatpush.xpose.msra.mxu0 0.0
    %2465 = vmatpush.xpose.msra.mxu0 0.0
    %2466 = vmatpush.xpose.msra.mxu0 0.0
    %2467 = vmatpush.xpose.msra.mxu0 0.0
    %2468 = vmatpush.xpose.msra.mxu0 0.0
    %2469 = vmatpush.xpose.msra.mxu0 0.0
    %2470 = vmatpush.xpose.msra.mxu0 0.0
    %2471 = vmatpush.xpose.msra.mxu0 0.0
    %2472 = vmatpush.xpose.msra.mxu0 0.0
    %2473 = vmatpush.xpose.msra.mxu0 0.0
    %2474 = vmatpush.xpose.msra.mxu0 0.0
    %2475 = vmatpush.xpose.msra.mxu0 0.0
    %2476 = vmatpush.xpose.msra.mxu0 %v538
    %2477 = vmatpush.xpose.msra.mxu0 %v440
    %2478 = vmatpush.xpose.msra.mxu0 %v342
    %2479 = vmatpush.xpose.msra.mxu0 %v244
    %2480 = vmatmul.f32.gmra.mxu0 %v688
    %v2481 = vpop.f32.mrf.mxu0
    %v2482 = vadd.f32 %v2462, %v2481
    %2483 = vdwg.mxu0
    %2484 = vmatpush.xpose.msra.mxu0 0.0
    %2485 = vmatpush.xpose.msra.mxu0 0.0
    %2486 = vmatpush.xpose.msra.mxu0 0.0
    %2487 = vmatpush.xpose.msra.mxu0 0.0
    %2488 = vmatpush.xpose.msra.mxu0 0.0
    %2489 = vmatpush.xpose.msra.mxu0 0.0
    %2490 = vmatpush.xpose.msra.mxu0 0.0
    %2491 = vmatpush.xpose.msra.mxu0 0.0
    %2492 = vmatpush.xpose.msra.mxu0 0.0
    %2493 = vmatpush.xpose.msra.mxu0 0.0
    %2494 = vmatpush.xpose.msra.mxu0 0.0
    %2495 = vmatpush.xpose.msra.mxu0 0.0
    %2496 = vmatpush.xpose.msra.mxu0 %v539
    %2497 = vmatpush.xpose.msra.mxu0 %v441
    %2498 = vmatpush.xpose.msra.mxu0 %v343
    %2499 = vmatpush.xpose.msra.mxu0 %v245
    %2500 = vmatmul.f32.gmra.mxu0 %v689
    %v2501 = vpop.f32.mrf.mxu0
    %v2502 = vadd.f32 %v2482, %v2501
    %2503 = vdwg.mxu0
    %2504 = vmatpush.xpose.msra.mxu0 0.0
    %2505 = vmatpush.xpose.msra.mxu0 0.0
    %2506 = vmatpush.xpose.msra.mxu0 0.0
    %2507 = vmatpush.xpose.msra.mxu0 0.0
    %2508 = vmatpush.xpose.msra.mxu0 0.0
    %2509 = vmatpush.xpose.msra.mxu0 0.0
    %2510 = vmatpush.xpose.msra.mxu0 0.0
    %2511 = vmatpush.xpose.msra.mxu0 0.0
    %2512 = vmatpush.xpose.msra.mxu0 0.0
    %2513 = vmatpush.xpose.msra.mxu0 0.0
    %2514 = vmatpush.xpose.msra.mxu0 0.0
    %2515 = vmatpush.xpose.msra.mxu0 0.0
    %2516 = vmatpush.xpose.msra.mxu0 %v540
    %2517 = vmatpush.xpose.msra.mxu0 %v442
    %2518 = vmatpush.xpose.msra.mxu0 %v344
    %2519 = vmatpush.xpose.msra.mxu0 %v246
    %2520 = vmatmul.f32.gmra.mxu0 %v690
    %v2521 = vpop.f32.mrf.mxu0
    %v2522 = vadd.f32 %v2502, %v2521
    %2523 = vdwg.mxu0
    %2524 = vmatpush.xpose.msra.mxu0 0.0
    %2525 = vmatpush.xpose.msra.mxu0 0.0
    %2526 = vmatpush.xpose.msra.mxu0 0.0
    %2527 = vmatpush.xpose.msra.mxu0 0.0
    %2528 = vmatpush.xpose.msra.mxu0 0.0
    %2529 = vmatpush.xpose.msra.mxu0 0.0
    %2530 = vmatpush.xpose.msra.mxu0 0.0
    %2531 = vmatpush.xpose.msra.mxu0 0.0
    %2532 = vmatpush.xpose.msra.mxu0 0.0
    %2533 = vmatpush.xpose.msra.mxu0 0.0
    %2534 = vmatpush.xpose.msra.mxu0 0.0
    %2535 = vmatpush.xpose.msra.mxu0 0.0
    %2536 = vmatpush.xpose.msra.mxu0 %v541
    %2537 = vmatpush.xpose.msra.mxu0 %v443
    %2538 = vmatpush.xpose.msra.mxu0 %v345
    %2539 = vmatpush.xpose.msra.mxu0 %v247
    %2540 = vmatmul.f32.gmra.mxu0 %v691
    %v2541 = vpop.f32.mrf.mxu0
    %v2542 = vadd.f32 %v2522, %v2541
    %2543 = vdwg.mxu0
    %2544 = vmatpush.xpose.msra.mxu0 0.0
    %2545 = vmatpush.xpose.msra.mxu0 0.0
    %2546 = vmatpush.xpose.msra.mxu0 0.0
    %2547 = vmatpush.xpose.msra.mxu0 0.0
    %2548 = vmatpush.xpose.msra.mxu0 0.0
    %2549 = vmatpush.xpose.msra.mxu0 0.0
    %2550 = vmatpush.xpose.msra.mxu0 0.0
    %2551 = vmatpush.xpose.msra.mxu0 0.0
    %2552 = vmatpush.xpose.msra.mxu0 0.0
    %2553 = vmatpush.xpose.msra.mxu0 0.0
    %2554 = vmatpush.xpose.msra.mxu0 0.0
    %2555 = vmatpush.xpose.msra.mxu0 0.0
    %2556 = vmatpush.xpose.msra.mxu0 %v542
    %2557 = vmatpush.xpose.msra.mxu0 %v444
    %2558 = vmatpush.xpose.msra.mxu0 %v346
    %2559 = vmatpush.xpose.msra.mxu0 %v248
    %2560 = vmatmul.f32.gmra.mxu0 %v692
    %v2561 = vpop.f32.mrf.mxu0
    %v2562 = vadd.f32 %v2542, %v2561
    %2563 = vdwg.mxu0
    %2564 = vmatpush.xpose.msra.mxu0 0.0
    %2565 = vmatpush.xpose.msra.mxu0 0.0
    %2566 = vmatpush.xpose.msra.mxu0 0.0
    %2567 = vmatpush.xpose.msra.mxu0 0.0
    %2568 = vmatpush.xpose.msra.mxu0 0.0
    %2569 = vmatpush.xpose.msra.mxu0 0.0
    %2570 = vmatpush.xpose.msra.mxu0 0.0
    %2571 = vmatpush.xpose.msra.mxu0 0.0
    %2572 = vmatpush.xpose.msra.mxu0 0.0
    %2573 = vmatpush.xpose.msra.mxu0 0.0
    %2574 = vmatpush.xpose.msra.mxu0 0.0
    %2575 = vmatpush.xpose.msra.mxu0 0.0
    %2576 = vmatpush.xpose.msra.mxu0 %v543
    %2577 = vmatpush.xpose.msra.mxu0 %v445
    %2578 = vmatpush.xpose.msra.mxu0 %v347
    %2579 = vmatpush.xpose.msra.mxu0 %v249
    %2580 = vmatmul.f32.gmra.mxu0 %v695
    %v2581 = vpop.f32.mrf.mxu0
    %v2582 = vadd.f32 %v2562, %v2581
    %2583 = vdwg.mxu0
    %2584 = vmatpush.xpose.msra.mxu0 0.0
    %2585 = vmatpush.xpose.msra.mxu0 0.0
    %2586 = vmatpush.xpose.msra.mxu0 0.0
    %2587 = vmatpush.xpose.msra.mxu0 0.0
    %2588 = vmatpush.xpose.msra.mxu0 0.0
    %2589 = vmatpush.xpose.msra.mxu0 0.0
    %2590 = vmatpush.xpose.msra.mxu0 0.0
    %2591 = vmatpush.xpose.msra.mxu0 0.0
    %2592 = vmatpush.xpose.msra.mxu0 0.0
    %2593 = vmatpush.xpose.msra.mxu0 0.0
    %2594 = vmatpush.xpose.msra.mxu0 0.0
    %2595 = vmatpush.xpose.msra.mxu0 0.0
    %2596 = vmatpush.xpose.msra.mxu0 %v544
    %2597 = vmatpush.xpose.msra.mxu0 %v446
    %2598 = vmatpush.xpose.msra.mxu0 %v348
    %2599 = vmatpush.xpose.msra.mxu0 %v250
    %2600 = vmatmul.f32.gmra.mxu0 %v696
    %v2601 = vpop.f32.mrf.mxu0
    %v2602 = vadd.f32 %v2582, %v2601
    %2603 = vdwg.mxu0
    %2604 = vmatpush.xpose.msra.mxu0 0.0
    %2605 = vmatpush.xpose.msra.mxu0 0.0
    %2606 = vmatpush.xpose.msra.mxu0 0.0
    %2607 = vmatpush.xpose.msra.mxu0 0.0
    %2608 = vmatpush.xpose.msra.mxu0 0.0
    %2609 = vmatpush.xpose.msra.mxu0 0.0
    %2610 = vmatpush.xpose.msra.mxu0 0.0
    %2611 = vmatpush.xpose.msra.mxu0 0.0
    %2612 = vmatpush.xpose.msra.mxu0 0.0
    %2613 = vmatpush.xpose.msra.mxu0 0.0
    %2614 = vmatpush.xpose.msra.mxu0 0.0
    %2615 = vmatpush.xpose.msra.mxu0 0.0
    %2616 = vmatpush.xpose.msra.mxu0 %v545
    %2617 = vmatpush.xpose.msra.mxu0 %v447
    %2618 = vmatpush.xpose.msra.mxu0 %v349
    %2619 = vmatpush.xpose.msra.mxu0 %v251
    %2620 = vmatmul.f32.gmra.mxu0 %v697
    %v2621 = vpop.f32.mrf.mxu0
    %v2622 = vadd.f32 %v2602, %v2621
    %2623 = vdwg.mxu0
    %2624 = vmatpush.xpose.msra.mxu0 0.0
    %2625 = vmatpush.xpose.msra.mxu0 0.0
    %2626 = vmatpush.xpose.msra.mxu0 0.0
    %2627 = vmatpush.xpose.msra.mxu0 0.0
    %2628 = vmatpush.xpose.msra.mxu0 0.0
    %2629 = vmatpush.xpose.msra.mxu0 0.0
    %2630 = vmatpush.xpose.msra.mxu0 0.0
    %2631 = vmatpush.xpose.msra.mxu0 0.0
    %2632 = vmatpush.xpose.msra.mxu0 0.0
    %2633 = vmatpush.xpose.msra.mxu0 0.0
    %2634 = vmatpush.xpose.msra.mxu0 0.0
    %2635 = vmatpush.xpose.msra.mxu0 0.0
    %2636 = vmatpush.xpose.msra.mxu0 %v546
    %2637 = vmatpush.xpose.msra.mxu0 %v448
    %2638 = vmatpush.xpose.msra.mxu0 %v350
    %2639 = vmatpush.xpose.msra.mxu0 %v252
    %2640 = vmatmul.f32.gmra.mxu0 %v698
    %v2641 = vpop.f32.mrf.mxu0
    %v2642 = vadd.f32 %v2622, %v2641
    %2643 = vdwg.mxu0
    %2644 = vmatpush.xpose.msra.mxu0 0.0
    %2645 = vmatpush.xpose.msra.mxu0 0.0
    %2646 = vmatpush.xpose.msra.mxu0 0.0
    %2647 = vmatpush.xpose.msra.mxu0 0.0
    %2648 = vmatpush.xpose.msra.mxu0 0.0
    %2649 = vmatpush.xpose.msra.mxu0 0.0
    %2650 = vmatpush.xpose.msra.mxu0 0.0
    %2651 = vmatpush.xpose.msra.mxu0 0.0
    %2652 = vmatpush.xpose.msra.mxu0 0.0
    %2653 = vmatpush.xpose.msra.mxu0 0.0
    %2654 = vmatpush.xpose.msra.mxu0 0.0
    %2655 = vmatpush.xpose.msra.mxu0 0.0
    %2656 = vmatpush.xpose.msra.mxu0 %v547
    %2657 = vmatpush.xpose.msra.mxu0 %v449
    %2658 = vmatpush.xpose.msra.mxu0 %v351
    %2659 = vmatpush.xpose.msra.mxu0 %v253
    %2660 = vmatmul.f32.gmra.mxu0 %v699
    %v2661 = vpop.f32.mrf.mxu0
    %v2662 = vadd.f32 %v2642, %v2661
    %2663 = vdwg.mxu0
    %2664 = vmatpush.xpose.msra.mxu0 0.0
    %2665 = vmatpush.xpose.msra.mxu0 0.0
    %2666 = vmatpush.xpose.msra.mxu0 0.0
    %2667 = vmatpush.xpose.msra.mxu0 0.0
    %2668 = vmatpush.xpose.msra.mxu0 0.0
    %2669 = vmatpush.xpose.msra.mxu0 0.0
    %2670 = vmatpush.xpose.msra.mxu0 0.0
    %2671 = vmatpush.xpose.msra.mxu0 0.0
    %2672 = vmatpush.xpose.msra.mxu0 0.0
    %2673 = vmatpush.xpose.msra.mxu0 0.0
    %2674 = vmatpush.xpose.msra.mxu0 0.0
    %2675 = vmatpush.xpose.msra.mxu0 0.0
    %2676 = vmatpush.xpose.msra.mxu0 %v548
    %2677 = vmatpush.xpose.msra.mxu0 %v450
    %2678 = vmatpush.xpose.msra.mxu0 %v352
    %2679 = vmatpush.xpose.msra.mxu0 %v254
    %2680 = vmatmul.f32.gmra.mxu0 %v700
    %v2681 = vpop.f32.mrf.mxu0
    %v2682 = vadd.f32 %v2662, %v2681
    %2683 = vdwg.mxu0
    %2684 = vmatpush.xpose.msra.mxu0 0.0
    %2685 = vmatpush.xpose.msra.mxu0 0.0
    %2686 = vmatpush.xpose.msra.mxu0 0.0
    %2687 = vmatpush.xpose.msra.mxu0 0.0
    %2688 = vmatpush.xpose.msra.mxu0 0.0
    %2689 = vmatpush.xpose.msra.mxu0 0.0
    %2690 = vmatpush.xpose.msra.mxu0 0.0
    %2691 = vmatpush.xpose.msra.mxu0 0.0
    %2692 = vmatpush.xpose.msra.mxu0 0.0
    %2693 = vmatpush.xpose.msra.mxu0 0.0
    %2694 = vmatpush.xpose.msra.mxu0 0.0
    %2695 = vmatpush.xpose.msra.mxu0 0.0
    %2696 = vmatpush.xpose.msra.mxu0 %v549
    %2697 = vmatpush.xpose.msra.mxu0 %v451
    %2698 = vmatpush.xpose.msra.mxu0 %v353
    %2699 = vmatpush.xpose.msra.mxu0 %v255
    %2700 = vmatmul.f32.gmra.mxu0 %v701
    %v2701 = vpop.f32.mrf.mxu0
    %v2702 = vadd.f32 %v2682, %v2701
    %2703 = vdwg.mxu0
    %2704 = vmatpush.xpose.msra.mxu0 0.0
    %2705 = vmatpush.xpose.msra.mxu0 0.0
    %2706 = vmatpush.xpose.msra.mxu0 0.0
    %2707 = vmatpush.xpose.msra.mxu0 0.0
    %2708 = vmatpush.xpose.msra.mxu0 0.0
    %2709 = vmatpush.xpose.msra.mxu0 0.0
    %2710 = vmatpush.xpose.msra.mxu0 0.0
    %2711 = vmatpush.xpose.msra.mxu0 0.0
    %2712 = vmatpush.xpose.msra.mxu0 0.0
    %2713 = vmatpush.xpose.msra.mxu0 0.0
    %2714 = vmatpush.xpose.msra.mxu0 0.0
    %2715 = vmatpush.xpose.msra.mxu0 0.0
    %2716 = vmatpush.xpose.msra.mxu0 %v550
    %2717 = vmatpush.xpose.msra.mxu0 %v452
    %2718 = vmatpush.xpose.msra.mxu0 %v354
    %2719 = vmatpush.xpose.msra.mxu0 %v256
    %2720 = vmatmul.f32.gmra.mxu0 %v702
    %v2721 = vpop.f32.mrf.mxu0
    %v2722 = vadd.f32 %v2702, %v2721
    %2723 = vdwg.mxu0
    %2724 = vmatpush.xpose.msra.mxu0 0.0
    %2725 = vmatpush.xpose.msra.mxu0 0.0
    %2726 = vmatpush.xpose.msra.mxu0 0.0
    %2727 = vmatpush.xpose.msra.mxu0 0.0
    %2728 = vmatpush.xpose.msra.mxu0 0.0
    %2729 = vmatpush.xpose.msra.mxu0 0.0
    %2730 = vmatpush.xpose.msra.mxu0 0.0
    %2731 = vmatpush.xpose.msra.mxu0 0.0
    %2732 = vmatpush.xpose.msra.mxu0 0.0
    %2733 = vmatpush.xpose.msra.mxu0 0.0
    %2734 = vmatpush.xpose.msra.mxu0 0.0
    %2735 = vmatpush.xpose.msra.mxu0 0.0
    %2736 = vmatpush.xpose.msra.mxu0 %v551
    %2737 = vmatpush.xpose.msra.mxu0 %v453
    %2738 = vmatpush.xpose.msra.mxu0 %v355
    %2739 = vmatpush.xpose.msra.mxu0 %v257
    %2740 = vmatmul.f32.gmra.mxu0 %v704
    %v2741 = vpop.f32.mrf.mxu0
    %v2742 = vadd.f32 %v2722, %v2741
    %2743 = vdwg.mxu0
    %2744 = vmatpush.xpose.msra.mxu0 0.0
    %2745 = vmatpush.xpose.msra.mxu0 0.0
    %2746 = vmatpush.xpose.msra.mxu0 0.0
    %2747 = vmatpush.xpose.msra.mxu0 0.0
    %2748 = vmatpush.xpose.msra.mxu0 0.0
    %2749 = vmatpush.xpose.msra.mxu0 0.0
    %2750 = vmatpush.xpose.msra.mxu0 0.0
    %2751 = vmatpush.xpose.msra.mxu0 0.0
    %2752 = vmatpush.xpose.msra.mxu0 0.0
    %2753 = vmatpush.xpose.msra.mxu0 0.0
    %2754 = vmatpush.xpose.msra.mxu0 0.0
    %2755 = vmatpush.xpose.msra.mxu0 0.0
    %2756 = vmatpush.xpose.msra.mxu0 %v552
    %2757 = vmatpush.xpose.msra.mxu0 %v454
    %2758 = vmatpush.xpose.msra.mxu0 %v356
    %2759 = vmatpush.xpose.msra.mxu0 %v258
    %2760 = vmatmul.f32.gmra.mxu0 %v705
    %v2761 = vpop.f32.mrf.mxu0
    %v2762 = vadd.f32 %v2742, %v2761
    %2763 = vdwg.mxu0
    %v2764 = vmax.f32 %v2762, 0.0
    %vm2765 = vcmask 254976
    %2766 = vst.msk [vmem:[#allocation9] sm:$0x3] %vm2765, %v2764
    // Predicated region
    $region26: #{yolov3_encoder_head.1} parent=1 // pred_check
      _
    $region27: #{yolov3_encoder_head.1} parent=1 // pred_check_branch
      %2768 = sbr.rel (0) target = $region29
    $region28: #{yolov3_encoder_head.1} parent=1 // pred_region
      %2770 = vsyncadd [#allocation5], 0
      %s2772 = sshll.u32 [#allocation9], 4
      %s2773 = int_to_ptr.vmem [resolvable:$true] %s2772
      %s2774 = sshll.u32 %s3, 4
      %s2775 = int_to_ptr.hbm [resolvable:$true] %s2774
      %2777 = dma.vmem_to_hbm [thread:$0]  %s2773, 32, %s2775, [#allocation5]
    $region29: #{yolov3_encoder_head.1} parent=1 // pred_fallthru
      _
    // Predicated region
    $region30: #{yolov3_encoder_head.1} parent=1 // pred_check
      _
    $region31: #{yolov3_encoder_head.1} parent=1 // pred_check_branch
      %2779 = sbr.rel (0) target = $region33
    $region32: #{yolov3_encoder_head.1} parent=1 // pred_region
      %2781 = dma.done [#allocation5], 32
    $region33: #{yolov3_encoder_head.1} parent=1 // pred_fallthru
      _
    %2782 = vsyncpa [#allocation4], 1
    %2783 = vsyncpa [#allocation7], 1
    %2784 = vsyncpa [#allocation5], 1

</llo_original>
